<compile_context>
chip_gen: v5e
topology: v5e:2x2
jax: 0.10.0
libtpu: 0.0.40
codegen_flags: <defaults>
</compile_context>

<pallas_src>
import jax
import jax.numpy as jnp
from jax.experimental import pallas as pl
from jax.experimental.pallas import tpu as pltpu


# ----------------------------------------------------------------------------
# Pallas kernel: one (batch, query-tile) step of the self-attention hot path.
# ----------------------------------------------------------------------------
def _self_attn_body(x_ref, phiT_ref, g_ref, brow_ref,
                    wth_ref, wat_ref, bat_ref, sigma_ref,
                    out_ref, attn_ref):
    x_t = x_ref[0]                                   # (tn, C) f32, residual path
    x_b = x_t.astype(jnp.bfloat16)                   # bf16 operand for the MXU

    # theta 1x1 conv (bias folded into brow below).
    theta = jnp.dot(x_b, wth_ref[...],
                    preferred_element_type=jnp.float32)          # (tn, C8)
    theta_b = theta.astype(jnp.bfloat16)

    # scores: canonical (M,K)x(K,N) MXU matmul against the transposed,
    # lane-dense pooled phi; theta bias enters as the precomputed row.
    scores = jnp.dot(theta_b, phiT_ref[0],
                     preferred_element_type=jnp.float32) + brow_ref[0]  # (tn, Np)

    # softmax over the pooled-key axis (f32 stats, EUP reciprocal), single
    # bf16 cast reused for the writeback and the attn @ g matmul operand.
    m = jnp.max(scores, axis=-1, keepdims=True)
    e = jnp.exp(scores - m)
    denom = jnp.sum(e, axis=-1, keepdims=True)
    attn_bf = (e * pl.reciprocal(denom, approx=True)).astype(jnp.bfloat16)
    if attn_ref is not None:
        attn_ref[0] = attn_bf.astype(attn_ref.dtype)

    # attn @ g  ->  final 1x1 conv  ->  residual add (f32).
    ag = jnp.dot(attn_bf, g_ref[0],
                 preferred_element_type=jnp.float32)             # (tn, C2)
    ac = jnp.dot(ag.astype(jnp.bfloat16), wat_ref[...],
                 preferred_element_type=jnp.float32) + bat_ref[...]   # (tn, C)

    out_ref[0] = (x_t + sigma_ref[0, 0] * ac).astype(out_ref.dtype)


def _self_attn_kernel_attn(x_ref, phiT_ref, g_ref, brow_ref,
                           wth_ref, wat_ref, bat_ref, sigma_ref,
                           out_ref, attn_ref):
    _self_attn_body(x_ref, phiT_ref, g_ref, brow_ref,
                    wth_ref, wat_ref, bat_ref, sigma_ref, out_ref, attn_ref)


def _self_attn_kernel_noattn(x_ref, phiT_ref, g_ref, brow_ref,
                             wth_ref, wat_ref, bat_ref, sigma_ref,
                             out_ref):
    _self_attn_body(x_ref, phiT_ref, g_ref, brow_ref,
                    wth_ref, wat_ref, bat_ref, sigma_ref, out_ref, None)


# ----------------------------------------------------------------------------
# Wrapper: layout plumbing, hoisted pooled phi/g precompute, pallas_call
# ----------------------------------------------------------------------------
def self_attn_forward(x_nchw, params, *, tile_n=256, return_attn=True,
                      attn_dtype=jnp.bfloat16, out_dtype=jnp.float32):
    """params = (wth, bth, wph, bph, wg, bg, wat, bat, sigma) with PyTorch-layout
    (C_out, C_in) weights already spectrally normalized."""
    wth, bth, wph, bph, wg, bg, wat, bat, sigma = params
    B, C, H, W = x_nchw.shape
    N = H * W
    Np = N // 4
    C8 = C // 8
    C2 = C // 2

    x_f32 = x_nchw.astype(jnp.float32)
    x_flat = jnp.transpose(x_f32, (0, 2, 3, 1)).reshape(B, N, C)   # pixel-major

    # ---- hoisted once-per-batch precompute (plain XLA): fused phi|g 1x1 conv
    # ---- + MaxPool2d(2,2); pooled positions row-major (ph*(W/2)+pw).
    wpg_t = jnp.concatenate([jnp.asarray(wph, jnp.float32).T,
                             jnp.asarray(wg, jnp.float32).T], axis=1)   # (C, C8+C2)
    bpg = jnp.concatenate([jnp.asarray(bph, jnp.float32),
                           jnp.asarray(bg, jnp.float32)])               # (C8+C2,)
    pg = x_flat @ wpg_t + bpg                                           # (B, N, C8+C2)
    pg = pg.reshape(B, H // 2, 2, W // 2, 2, C8 + C2).max(axis=(2, 4))
    pg = pg.reshape(B, Np, C8 + C2)
    phi_p = pg[:, :, :C8]                                               # (B, Np, C8) f32
    g_p = pg[:, :, C8:].astype(jnp.bfloat16)                            # (B, Np, C2) bf16
    # theta bias folded into a per-batch score row: brow[b, m] = sum_c bth[c]*phi[b,m,c]
    brow = (phi_p @ jnp.asarray(bth, jnp.float32)).reshape(B, 1, Np)    # f32
    phi_T = jnp.transpose(phi_p, (0, 2, 1)).astype(jnp.bfloat16)        # (B, C8, Np)

    # remaining weights -> (C_in, C_out) bf16 for the MXU; biases stay f32.
    wth_t = jnp.asarray(wth, jnp.float32).T.astype(jnp.bfloat16)        # (C, C8)
    wat_t = jnp.asarray(wat, jnp.float32).T.astype(jnp.bfloat16)        # (C2, C)
    bat2 = jnp.asarray(bat, jnp.float32).reshape(1, C)
    sigma2 = jnp.asarray(sigma, jnp.float32).reshape(1, 1)

    # ---- VMEM budgeting (generation-aware) and query-tile selection --------
    try:
        phys_vmem = int(pltpu.get_tpu_info().vmem_capacity_bytes)
    except Exception:
        phys_vmem = 64 * 1024 * 1024                       # conservative (v7x)
    vmem_cap = int(0.75 * phys_vmem)                       # ~25% headroom

    attn_itemsize = jnp.dtype(attn_dtype).itemsize
    out_itemsize = jnp.dtype(out_dtype).itemsize

    def vmem_est(tn):
        blocks = (tn * C * 4                               # x tile
                  + C8 * Np * 2 + Np * C2 * 2 + Np * 4     # pooled phi^T, g, brow
                  + (C * C8 + C2 * C) * 2 + C * 4          # weights + bias
                  + tn * C * out_itemsize)                 # out tile
        if return_attn:
            blocks += tn * Np * attn_itemsize              # attn tile
        # double-buffered pipeline copies + large f32/bf16 intermediates
        interm = tn * Np * (4 + 4 + 2) + tn * (4 * C8 + 6 * C2 + 8 * C)
        return 2 * blocks + interm

    divisors = [t for t in range(min(tile_n, N), 0, -1)
                if N % t == 0 and (t % 8 == 0 or t == N)]
    if not divisors:
        divisors = [N]
    tn = next((t for t in divisors if vmem_est(t) <= vmem_cap), divisors[-1])
    n_tiles = N // tn
    vmem_limit = int(min(max(vmem_est(tn), 32 * 1024 * 1024), vmem_cap))

    flops = 2 * B * (N * C * C8          # theta conv
                     + N * Np * C8       # scores
                     + N * Np * C2       # attn @ g
                     + N * C2 * C)       # final conv
    transcendentals = B * N * (Np + 1)   # exp + reciprocal
    bytes_accessed = int(B * N * C * 4                              # x read
                         + B * Np * (C8 + C2) * 2 + B * Np * 4      # pooled phi/g, brow
                         + (C * C8 + C2 * C) * 2 + (C + 1) * 4      # weights
                         + B * N * C * out_itemsize                 # out write
                         + (B * N * Np * attn_itemsize if return_attn else 0))

    in_specs = [
        pl.BlockSpec((1, tn, C), lambda b, n: (b, n, 0)),       # x query tile (f32)
        pl.BlockSpec((1, C8, Np), lambda b, n: (b, 0, 0)),      # pooled phi^T, resident / b
        pl.BlockSpec((1, Np, C2), lambda b, n: (b, 0, 0)),      # pooled g,     resident / b
        pl.BlockSpec((1, 1, Np), lambda b, n: (b, 0, 0)),       # folded theta-bias row
        pl.BlockSpec((C, C8), lambda b, n: (0, 0)),             # theta conv weight
        pl.BlockSpec((C2, C), lambda b, n: (0, 0)),             # final conv weight
        pl.BlockSpec((1, C), lambda b, n: (0, 0)),              # final conv bias
        pl.BlockSpec(memory_space=pltpu.MemorySpace.SMEM),      # sigma scalar
    ]
    out_spec_out = pl.BlockSpec((1, tn, C), lambda b, n: (b, n, 0))
    if return_attn:
        kernel = _self_attn_kernel_attn
        out_shape = (jax.ShapeDtypeStruct((B, N, C), out_dtype),
                     jax.ShapeDtypeStruct((B, N, Np), attn_dtype))
        out_specs = [out_spec_out,
                     pl.BlockSpec((1, tn, Np), lambda b, n: (b, n, 0))]
    else:
        kernel = _self_attn_kernel_noattn
        out_shape = jax.ShapeDtypeStruct((B, N, C), out_dtype)
        out_specs = out_spec_out

    result = pl.pallas_call(
        kernel,
        out_shape=out_shape,
        grid=(B, n_tiles),
        in_specs=in_specs,
        out_specs=out_specs,
        compiler_params=pltpu.CompilerParams(
            # no cross-step scratch dependence -> both axes parallel
            dimension_semantics=("parallel", "parallel"),
            vmem_limit_bytes=vmem_limit),
        cost_estimate=pl.CostEstimate(flops=flops,
                                      transcendentals=transcendentals,
                                      bytes_accessed=bytes_accessed),
    )(x_flat, phi_T, g_p, brow, wth_t, wat_t, bat2, sigma2)

    if return_attn:
        out, attn = result
    else:
        out, attn = result, None
    out_nchw = out.reshape(B, H, W, C).transpose(0, 3, 1, 2)
    return (out_nchw, attn) if return_attn else out_nchw


# ----------------------------------------------------------------------------
# Parameter setup (deterministic) incl. spectral normalization of weights
# ----------------------------------------------------------------------------
def _spectral_normalize(w, n_iter=50, eps=1e-12):
    # w: (C_out, C_in); divide by an estimate of the largest singular value.
    # TODO(synk): torch spectral_norm does ONE power iteration per forward with
    # a persistent random u buffer; we use a converged deterministic estimate.
    u = jnp.ones((w.shape[0],), jnp.float32)
    u = u / (jnp.linalg.norm(u) + eps)
    for _ in range(n_iter):
        v = w.T @ u
        v = v / (jnp.linalg.norm(v) + eps)
        u = w @ v
        u = u / (jnp.linalg.norm(u) + eps)
    sigma = u @ (w @ v)
    return w / sigma


def make_params(key, C):
    C8, C2 = C // 8, C // 2
    ks = jax.random.split(key, 8)
    wth = _spectral_normalize(0.1 * jax.random.normal(ks[0], (C8, C), jnp.float32))
    bth = 0.1 * jax.random.normal(ks[1], (C8,), jnp.float32)
    wph = _spectral_normalize(0.1 * jax.random.normal(ks[2], (C8, C), jnp.float32))
    bph = 0.1 * jax.random.normal(ks[3], (C8,), jnp.float32)
    wg = _spectral_normalize(0.1 * jax.random.normal(ks[4], (C2, C), jnp.float32))
    bg = 0.1 * jax.random.normal(ks[5], (C2,), jnp.float32)
    wat = _spectral_normalize(0.1 * jax.random.normal(ks[6], (C, C2), jnp.float32))
    bat = 0.1 * jax.random.normal(ks[7], (C,), jnp.float32)
    # torch initializes sigma (gamma) = 0, i.e. out == x; use a nonzero sigma
    # here so the attention path is actually exercised by the check.
    sigma = jnp.array([0.5], jnp.float32)
    return (wth, bth, wph, bph, wg, bg, wat, bat, sigma)


# ----------------------------------------------------------------------------
# Pure-JAX f32 reference (mirrors the PyTorch forward, NCHW)
# ----------------------------------------------------------------------------
def _maxpool2(y):
    B, C, H, W = y.shape
    return jnp.max(y.reshape(B, C, H // 2, 2, W // 2, 2), axis=(3, 5))


def reference_forward(x, params):
    wth, bth, wph, bph, wg, bg, wat, bat, sigma = params
    B, C, H, W = x.shape
    N = H * W
    theta = jnp.einsum('oc,bchw->bohw', wth, x) + bth[None, :, None, None]
    theta = theta.reshape(B, C // 8, N)
    phi = jnp.einsum('oc,bchw->bohw', wph, x) + bph[None, :, None, None]
    phi = _maxpool2(phi).reshape(B, C // 8, N // 4)
    attn1 = jnp.einsum('bcn,bcm->bnm', theta, phi)
    attn = jax.nn.softmax(attn1, axis=-1)
    g = jnp.einsum('oc,bchw->bohw', wg, x) + bg[None, :, None, None]
    g = _maxpool2(g).reshape(B, C // 2, N // 4)
    attn_g = jnp.einsum('bcm,bnm->bcn', g, attn).reshape(B, C // 2, H, W)
    attn_g = jnp.einsum('oc,bchw->bohw', wat, attn_g) + bat[None, :, None, None]
    out = x + sigma * attn_g
    return out, attn


if __name__ == "__main__":
    key = jax.random.PRNGKey(0)
    kx, kp = jax.random.split(key)

    B, C, H, W = 2, 64, 16, 16        # C divisible by 8; H, W even
    x = jax.random.normal(kx, (B, C, H, W), jnp.float32)
    params = make_params(kp, C)

    # default path (matches the torch module: returns (out, attn))
    out, attn = jax.block_until_ready(self_attn_forward(x, params))
    # fast path with the dominant HBM writeback removed
    out_noattn = jax.block_until_ready(
        self_attn_forward(x, params, return_attn=False))

    out_ref, attn_ref = reference_forward(x, params)
    assert out.shape == (B, C, H, W)
    assert attn.shape == (B, H * W, H * W // 4)
    # bf16 MXU operands + bf16 attention writeback -> looser tolerance than a
    # pure-f32 kernel; layout/pooling/softmax bugs would still be O(1) errors.
    assert jnp.allclose(out, out_ref, atol=3e-2, rtol=3e-2)
    assert jnp.allclose(attn.astype(jnp.float32), attn_ref, atol=3e-2, rtol=3e-2)
    assert jnp.allclose(out_noattn, out_ref, atol=3e-2, rtol=3e-2)

    print("KERNEL_OK")
</pallas_src>

<mosaic_0001>
module attributes {stable_mosaic.version = 11 : i64} {
  func.func @_self_attn_kernel_attn(%arg0: i32, %arg1: i32, %arg2: memref<1x256x64xf32, #tpu.memory_space<vmem>>, %arg3: memref<1x8x64xbf16, #tpu.memory_space<vmem>>, %arg4: memref<1x64x32xbf16, #tpu.memory_space<vmem>>, %arg5: memref<1x1x64xf32, #tpu.memory_space<vmem>>, %arg6: memref<64x8xbf16, #tpu.memory_space<vmem>>, %arg7: memref<32x64xbf16, #tpu.memory_space<vmem>>, %arg8: memref<1x64xf32, #tpu.memory_space<vmem>>, %arg9: memref<1x1xf32, #tpu.memory_space<smem>>, %arg10: memref<1x256x64xf32, #tpu.memory_space<vmem>>, %arg11: memref<1x256x64xbf16, #tpu.memory_space<vmem>>) attributes {dimension_semantics = [#tpu.dimension_semantics<parallel>, #tpu.dimension_semantics<parallel>], iteration_bounds = array<i64: 2, 1>, scalar_prefetch = 0 : i64, scratch_operands = 0 : i64, tpu.core_type = #tpu.core_type<tc>, window_params = [{transform_indices = @transform_0, window_bounds = array<i64: 1, 256, 64>}, {transform_indices = @transform_1, window_bounds = array<i64: 1, 8, 64>}, {transform_indices = @transform_2, window_bounds = array<i64: 1, 64, 32>}, {transform_indices = @transform_3, window_bounds = array<i64: 1, 1, 64>}, {pipeline_mode = #tpu.pipeline_mode<synchronous>, transform_indices = @transform_4, window_bounds = array<i64: 64, 8>}, {pipeline_mode = #tpu.pipeline_mode<synchronous>, transform_indices = @transform_5, window_bounds = array<i64: 32, 64>}, {pipeline_mode = #tpu.pipeline_mode<synchronous>, transform_indices = @transform_6, window_bounds = array<i64: 1, 64>}, {transform_indices = @transform_7, window_bounds = array<i64: 1, 1>}, {transform_indices = @transform_8, window_bounds = array<i64: 1, 256, 64>}, {transform_indices = @transform_9, window_bounds = array<i64: 1, 256, 64>}]} {
    %c0 = arith.constant 0 : index
    %c0_0 = arith.constant 0 : index
    %c0_1 = arith.constant 0 : index
    %0 = vector.load %arg2[%c0, %c0_0, %c0_1] : memref<1x256x64xf32, #tpu.memory_space<vmem>>, vector<1x256x64xf32>
    %1 = vector.shape_cast %0 : vector<1x256x64xf32> to vector<256x64xf32>
    %2 = arith.truncf %1 : vector<256x64xf32> to vector<256x64xbf16>
    %c0_2 = arith.constant 0 : index
    %c0_3 = arith.constant 0 : index
    %3 = vector.load %arg6[%c0_2, %c0_3] : memref<64x8xbf16, #tpu.memory_space<vmem>>, vector<64x8xbf16>
    %cst = arith.constant dense<0.000000e+00> : vector<256x8xf32>
    %4 = tpu.matmul %2, %3, %cst {dimension_numbers = #tpu.dot_dimension_numbers<[1], [0], [0], [1], [0, 0, 1, 1], [], []>} : vector<256x64xbf16>, vector<64x8xbf16>, vector<256x8xf32> -> vector<256x8xf32>
    %5 = arith.truncf %4 : vector<256x8xf32> to vector<256x8xbf16>
    %c0_4 = arith.constant 0 : index
    %c0_5 = arith.constant 0 : index
    %c0_6 = arith.constant 0 : index
    %6 = vector.load %arg3[%c0_4, %c0_5, %c0_6] : memref<1x8x64xbf16, #tpu.memory_space<vmem>>, vector<1x8x64xbf16>
    %7 = vector.shape_cast %6 : vector<1x8x64xbf16> to vector<8x64xbf16>
    %cst_7 = arith.constant dense<0.000000e+00> : vector<256x64xf32>
    %8 = tpu.matmul %5, %7, %cst_7 {dimension_numbers = #tpu.dot_dimension_numbers<[1], [0], [0], [1], [0, 0, 1, 1], [], []>} : vector<256x8xbf16>, vector<8x64xbf16>, vector<256x64xf32> -> vector<256x64xf32>
    %c0_8 = arith.constant 0 : index
    %c0_9 = arith.constant 0 : index
    %c0_10 = arith.constant 0 : index
    %9 = vector.load %arg5[%c0_8, %c0_9, %c0_10] : memref<1x1x64xf32, #tpu.memory_space<vmem>>, vector<1x1x64xf32>
    %10 = vector.shape_cast %9 : vector<1x1x64xf32> to vector<1x64xf32>
    %11 = vector.broadcast %10 : vector<1x64xf32> to vector<256x64xf32>
    %12 = arith.addf %8, %11 : vector<256x64xf32>
    %cst_11 = arith.constant dense<0xFF800000> : vector<256xf32>
    %13 = vector.multi_reduction <maximumf>, %12, %cst_11 [1] : vector<256x64xf32> to vector<256xf32>
    %14 = vector.shape_cast %13 : vector<256xf32> to vector<256x1xf32>
    %15 = vector.broadcast %14 : vector<256x1xf32> to vector<256x64xf32>
    %16 = arith.subf %12, %15 : vector<256x64xf32>
    %17 = math.exp %16 : vector<256x64xf32>
    %cst_12 = arith.constant dense<0.000000e+00> : vector<256xf32>
    %18 = vector.multi_reduction <add>, %17, %cst_12 [1] : vector<256x64xf32> to vector<256xf32>
    %19 = vector.shape_cast %18 : vector<256xf32> to vector<256x1xf32>
    %20 = tpu.reciprocal %19 {approx = true} : vector<256x1xf32> -> vector<256x1xf32>
    %21 = vector.broadcast %20 : vector<256x1xf32> to vector<256x64xf32>
    %22 = arith.mulf %17, %21 : vector<256x64xf32>
    %23 = arith.truncf %22 : vector<256x64xf32> to vector<256x64xbf16>
    %c0_13 = arith.constant 0 : index
    %c0_14 = arith.constant 0 : index
    %c0_15 = arith.constant 0 : index
    %24 = vector.load %arg11[%c0_13, %c0_14, %c0_15] : memref<1x256x64xbf16, #tpu.memory_space<vmem>>, vector<1x256x64xbf16>
    %25 = vector.shape_cast %24 : vector<1x256x64xbf16> to vector<256x64xbf16>
    %26 = vector.shape_cast %23 : vector<256x64xbf16> to vector<1x256x64xbf16>
    tpu.vector_store %arg11[%c0_13, %c0_14, %c0_15], %26 {strides = array<i32>} : memref<1x256x64xbf16, #tpu.memory_space<vmem>>, vector<1x256x64xbf16>,
    %c0_16 = arith.constant 0 : index
    %c0_17 = arith.constant 0 : index
    %c0_18 = arith.constant 0 : index
    %27 = vector.load %arg4[%c0_16, %c0_17, %c0_18] : memref<1x64x32xbf16, #tpu.memory_space<vmem>>, vector<1x64x32xbf16>
    %28 = vector.shape_cast %27 : vector<1x64x32xbf16> to vector<64x32xbf16>
    %cst_19 = arith.constant dense<0.000000e+00> : vector<256x32xf32>
    %29 = tpu.matmul %23, %28, %cst_19 {dimension_numbers = #tpu.dot_dimension_numbers<[1], [0], [0], [1], [0, 0, 1, 1], [], []>} : vector<256x64xbf16>, vector<64x32xbf16>, vector<256x32xf32> -> vector<256x32xf32>
    %30 = arith.truncf %29 : vector<256x32xf32> to vector<256x32xbf16>
    %c0_20 = arith.constant 0 : index
    %c0_21 = arith.constant 0 : index
    %31 = vector.load %arg7[%c0_20, %c0_21] : memref<32x64xbf16, #tpu.memory_space<vmem>>, vector<32x64xbf16>
    %cst_22 = arith.constant dense<0.000000e+00> : vector<256x64xf32>
    %32 = tpu.matmul %30, %31, %cst_22 {dimension_numbers = #tpu.dot_dimension_numbers<[1], [0], [0], [1], [0, 0, 1, 1], [], []>} : vector<256x32xbf16>, vector<32x64xbf16>, vector<256x64xf32> -> vector<256x64xf32>
    %c0_23 = arith.constant 0 : index
    %c0_24 = arith.constant 0 : index
    %33 = vector.load %arg8[%c0_23, %c0_24] : memref<1x64xf32, #tpu.memory_space<vmem>>, vector<1x64xf32>
    %34 = vector.broadcast %33 : vector<1x64xf32> to vector<256x64xf32>
    %35 = arith.addf %32, %34 : vector<256x64xf32>
    %c0_25 = arith.constant 0 : index
    %c0_26 = arith.constant 0 : index
    %36 = memref.load %arg9[%c0_25, %c0_26] : memref<1x1xf32, #tpu.memory_space<smem>>
    %37 = vector.broadcast %36 : f32 to vector<256x64xf32>
    %38 = arith.mulf %37, %35 : vector<256x64xf32>
    %39 = arith.addf %1, %38 : vector<256x64xf32>
    %c0_27 = arith.constant 0 : index
    %c0_28 = arith.constant 0 : index
    %c0_29 = arith.constant 0 : index
    %40 = vector.load %arg10[%c0_27, %c0_28, %c0_29] : memref<1x256x64xf32, #tpu.memory_space<vmem>>, vector<1x256x64xf32>
    %41 = vector.shape_cast %40 : vector<1x256x64xf32> to vector<256x64xf32>
    %42 = vector.shape_cast %39 : vector<256x64xf32> to vector<1x256x64xf32>
    tpu.vector_store %arg10[%c0_27, %c0_28, %c0_29], %42 {strides = array<i32>} : memref<1x256x64xf32, #tpu.memory_space<vmem>>, vector<1x256x64xf32>,
    return
  }
  func.func @transform_0(%arg0: i32, %arg1: i32) -> (i32, i32, i32) {
    %c0_i32 = arith.constant 0 : i32
    %c0_i32_0 = arith.constant 0 : i32
    return %arg0, %arg1, %c0_i32 : i32, i32, i32
  }
  func.func @transform_1(%arg0: i32, %arg1: i32) -> (i32, i32, i32) {
    %c0_i32 = arith.constant 0 : i32
    %c0_i32_0 = arith.constant 0 : i32
    %c0_i32_1 = arith.constant 0 : i32
    return %arg0, %c0_i32, %c0_i32_0 : i32, i32, i32
  }
  func.func @transform_2(%arg0: i32, %arg1: i32) -> (i32, i32, i32) {
    %c0_i32 = arith.constant 0 : i32
    %c0_i32_0 = arith.constant 0 : i32
    %c0_i32_1 = arith.constant 0 : i32
    return %arg0, %c0_i32, %c0_i32_0 : i32, i32, i32
  }
  func.func @transform_3(%arg0: i32, %arg1: i32) -> (i32, i32, i32) {
    %c0_i32 = arith.constant 0 : i32
    %c0_i32_0 = arith.constant 0 : i32
    %c0_i32_1 = arith.constant 0 : i32
    return %arg0, %c0_i32, %c0_i32_0 : i32, i32, i32
  }
  func.func @transform_4(%arg0: i32, %arg1: i32) -> (i32, i32) {
    %c0_i32 = arith.constant 0 : i32
    %c0_i32_0 = arith.constant 0 : i32
    %c0_i32_1 = arith.constant 0 : i32
    return %c0_i32, %c0_i32_0 : i32, i32
  }
  func.func @transform_5(%arg0: i32, %arg1: i32) -> (i32, i32) {
    %c0_i32 = arith.constant 0 : i32
    %c0_i32_0 = arith.constant 0 : i32
    %c0_i32_1 = arith.constant 0 : i32
    return %c0_i32, %c0_i32_0 : i32, i32
  }
  func.func @transform_6(%arg0: i32, %arg1: i32) -> (i32, i32) {
    %c0_i32 = arith.constant 0 : i32
    %c0_i32_0 = arith.constant 0 : i32
    %c0_i32_1 = arith.constant 0 : i32
    return %c0_i32, %c0_i32_0 : i32, i32
  }
  func.func @transform_7(%arg0: i32, %arg1: i32) -> (i32, i32) {
    %c0_i32 = arith.constant 0 : i32
    %c0_i32_0 = arith.constant 0 : i32
    %c0_i32_1 = arith.constant 0 : i32
    return %c0_i32, %c0_i32_0 : i32, i32
  }
  func.func @transform_8(%arg0: i32, %arg1: i32) -> (i32, i32, i32) {
    %c0_i32 = arith.constant 0 : i32
    %c0_i32_0 = arith.constant 0 : i32
    return %arg0, %arg1, %c0_i32 : i32, i32, i32
  }
  func.func @transform_9(%arg0: i32, %arg1: i32) -> (i32, i32, i32) {
    %c0_i32 = arith.constant 0 : i32
    %c0_i32_0 = arith.constant 0 : i32
    return %arg0, %arg1, %c0_i32 : i32, i32, i32
  }
}

</mosaic_0001>

<llo_original>
// kernel: tpu_custom_call.1
$region0: #{tpu_custom_call.1}
  #allocation0 [shape = 'u32[]', space=smem, size = 0x4, offset = 0x4, fixed_abs, tag = 'smem constant byte address 0x4 - core index']
  #allocation1 [shape = 'u32[72,128]{1,0:T(1,128)}', space=vmem, size = 0x9000, scoped, tag = 'internal scratch']
  #allocation2 [shape = 'f32[1,1]{1,0:T(1,128)S(6)}', space=smem, size = 0x200, scoped, tag = 'scoped memory for tpu_custom_call.1']
  %s0 = inlined_call_operand.vmem [shape: f32[2,256,64], index: 0, kind: input, shape index: {}]
  %s1 = inlined_call_operand.vmem [shape: bf16[2,8,64], index: 1, kind: input, shape index: {}]
  %s2 = inlined_call_operand.vmem [shape: bf16[2,64,32], index: 2, kind: input, shape index: {}]
  %s3 = inlined_call_operand.vmem [shape: f32[2,1,64], index: 3, kind: input, shape index: {}]
  %s4 = inlined_call_operand.vmem [shape: bf16[64,8], index: 4, kind: input, shape index: {}]
  %s5 = inlined_call_operand.vmem [shape: bf16[32,64], index: 5, kind: input, shape index: {}]
  %s6 = inlined_call_operand.vmem [shape: f32[1,64], index: 6, kind: input, shape index: {}]
  %s7 = inlined_call_operand.<no memory space> [shape: f32[1,1], index: 7, kind: input, shape index: {}]
  %s8 = inlined_call_operand.vmem [shape: f32[2,256,64], index: 8, kind: output, shape index: {0}]
  %s9 = inlined_call_operand.vmem [shape: bf16[2,256,64], index: 9, kind: output, shape index: {1}]
  %10 = xla_tuple %s8, %s9
  %s11 = sld [smem:[#allocation0]]
  $region73: #{tpu_custom_call.1} parent=0
    _
  %s13 = ssub.s32 1, %s11
  %s14 = scalar_select 0, %s13, %s11
  %15 = sst [smem:[#allocation2]] %s7
  loop: start=0, step=1, limit=4
  $region2: #{tpu_custom_call.1} parent=0 // loop_pre_header
    _
  $region3: #{tpu_custom_call.1} parent=0 // loop_header
    %s17 = sphi 0, %s21
    %p18 = scmp.ge.s32.totalorder %s17, 4
    %s24 = sphi 0, %s36
    %s25 = sphi 0, %s32
    %s26 = sphi 0, %s24
    %s27 = sphi 0, %s25
    %s28 = sphi 0, %s26
    %s29 = sphi 0, %s27
    %s41 = sphi 0, %s43
    %s44 = sphi 0, %s41
    %s45 = sphi 0, %s44
    %s61 = sphi 0, %s45
    %s67 = sphi 0, %s69
    %s70 = sphi 0, %s67
    %s71 = sphi 0, %s70
    %s87 = sphi 0, %s71
    %s93 = sphi 0, %s95
    %s96 = sphi 0, %s93
    %s97 = sphi 0, %s96
    %s113 = sphi 0, %s97
    %s119 = sphi 0, %s121
    %s122 = sphi 0, %s119
    %s123 = sphi 0, %s122
    %s139 = sphi 0, %s123
    %s143 = sphi 0, %s143
    %s145 = sphi 0, %s143
    %s146 = sphi 0, %s145
    %s160 = sphi 0, %s146
    %s164 = sphi 0, %s164
    %s166 = sphi 0, %s164
    %s167 = sphi 0, %s166
    %s181 = sphi 0, %s167
    %s185 = sphi 0, %s185
    %s187 = sphi 0, %s185
    %s188 = sphi 0, %s187
    %s202 = sphi 0, %s188
    %s206 = sphi 0, %s206
    %s208 = sphi 0, %s206
    %s209 = sphi 0, %s208
    %s223 = sphi 0, %s209
    %s231 = sphi 0, %s233
    %s234 = sphi 0, %s231
    %s235 = sphi 0, %s234
    %s251 = sphi 0, %s235
    %s259 = sphi 0, %s261
    %s262 = sphi 0, %s259
    %s263 = sphi 0, %s262
    %s279 = sphi 0, %s263
  $region4: #{tpu_custom_call.1} parent=0 // loop_header_branch
    %20 = sbr.rel (%p18) target = $region8
  $region5: #{tpu_custom_call.1} parent=0 // loop_body
    %s22 = ssub.s32 %s17, 1
    %s23 = ssub.s32 %s17, 2
    %s30 = sadd.s32 1, %s25
    %p31 = scmp.ge.s32.totalorder %s30, 1
    %s32 = scalar_select %p31, 0, %s30
    %s33 = sadd.s32 1, %s24
    %s34 = scalar_select %p31, %s33, %s24
    %p35 = scmp.ge.s32.totalorder %s34, 2
    %s36 = scalar_select %p35, 0, %s34
    %s37 = ssub.s32 %s24, %s36
    %s38 = ssub.s32 %s25, %s32
    %s39 = sor.u32 %s37, %s38
    %p40 = scmp.eq.s32.totalorder %s39, 0
    %s42 = sadd.s32 %s41, 1
    %s43 = scalar_select %p40, %s41, %s42
    %p46 = pneg %p40
    %p47 = scmp.eq.s32.totalorder %s17, 1
    %p48 = por %p46, %p47
    %p49 = scmp.ne.s32.totalorder %s41, %s44
    %p50 = scmp.eq.s32.totalorder %s17, 0
    %p51 = por %p49, %p50
    %p52 = scmp.ne.s32.totalorder %s41, %s44
    %p53 = scmp.eq.s32.totalorder %s22, 1
    %p54 = por %p52, %p53
    %p55 = scmp.ne.s32.totalorder %s44, %s45
    %p56 = scmp.eq.s32.totalorder %s22, 0
    %p57 = por %p55, %p56
    %p58 = scmp.ne.s32.totalorder %s44, %s45
    %p59 = scmp.eq.s32.totalorder %s23, 1
    %p60 = por %p58, %p59
    %p62 = scmp.ne.s32.totalorder %s45, %s61
    %p63 = scmp.eq.s32.totalorder %s23, 0
    %p64 = por %p62, %p63
    %s65 = ssub.s32 %s24, %s36
    %p66 = scmp.eq.s32.totalorder %s65, 0
    %s68 = sadd.s32 %s67, 1
    %s69 = scalar_select %p66, %s67, %s68
    %p72 = pneg %p66
    %p73 = scmp.eq.s32.totalorder %s17, 1
    %p74 = por %p72, %p73
    %p75 = scmp.ne.s32.totalorder %s67, %s70
    %p76 = scmp.eq.s32.totalorder %s17, 0
    %p77 = por %p75, %p76
    %p78 = scmp.ne.s32.totalorder %s67, %s70
    %p79 = scmp.eq.s32.totalorder %s22, 1
    %p80 = por %p78, %p79
    %p81 = scmp.ne.s32.totalorder %s70, %s71
    %p82 = scmp.eq.s32.totalorder %s22, 0
    %p83 = por %p81, %p82
    %p84 = scmp.ne.s32.totalorder %s70, %s71
    %p85 = scmp.eq.s32.totalorder %s23, 1
    %p86 = por %p84, %p85
    %p88 = scmp.ne.s32.totalorder %s71, %s87
    %p89 = scmp.eq.s32.totalorder %s23, 0
    %p90 = por %p88, %p89
    %s91 = ssub.s32 %s24, %s36
    %p92 = scmp.eq.s32.totalorder %s91, 0
    %s94 = sadd.s32 %s93, 1
    %s95 = scalar_select %p92, %s93, %s94
    %p98 = pneg %p92
    %p99 = scmp.eq.s32.totalorder %s17, 1
    %p100 = por %p98, %p99
    %p101 = scmp.ne.s32.totalorder %s93, %s96
    %p102 = scmp.eq.s32.totalorder %s17, 0
    %p103 = por %p101, %p102
    %p104 = scmp.ne.s32.totalorder %s93, %s96
    %p105 = scmp.eq.s32.totalorder %s22, 1
    %p106 = por %p104, %p105
    %p107 = scmp.ne.s32.totalorder %s96, %s97
    %p108 = scmp.eq.s32.totalorder %s22, 0
    %p109 = por %p107, %p108
    %p110 = scmp.ne.s32.totalorder %s96, %s97
    %p111 = scmp.eq.s32.totalorder %s23, 1
    %p112 = por %p110, %p111
    %p114 = scmp.ne.s32.totalorder %s97, %s113
    %p115 = scmp.eq.s32.totalorder %s23, 0
    %p116 = por %p114, %p115
    %s117 = ssub.s32 %s24, %s36
    %p118 = scmp.eq.s32.totalorder %s117, 0
    %s120 = sadd.s32 %s119, 1
    %s121 = scalar_select %p118, %s119, %s120
    %p124 = pneg %p118
    %p125 = scmp.eq.s32.totalorder %s17, 1
    %p126 = por %p124, %p125
    %p127 = scmp.ne.s32.totalorder %s119, %s122
    %p128 = scmp.eq.s32.totalorder %s17, 0
    %p129 = por %p127, %p128
    %p130 = scmp.ne.s32.totalorder %s119, %s122
    %p131 = scmp.eq.s32.totalorder %s22, 1
    %p132 = por %p130, %p131
    %p133 = scmp.ne.s32.totalorder %s122, %s123
    %p134 = scmp.eq.s32.totalorder %s22, 0
    %p135 = por %p133, %p134
    %p136 = scmp.ne.s32.totalorder %s122, %s123
    %p137 = scmp.eq.s32.totalorder %s23, 1
    %p138 = por %p136, %p137
    %p140 = scmp.ne.s32.totalorder %s123, %s139
    %p141 = scmp.eq.s32.totalorder %s23, 0
    %p142 = por %p140, %p141
    %s144 = sadd.s32 %s143, 1
    %p147 = scmp.eq.s32.totalorder %s17, 1
    %p148 = scmp.ne.s32.totalorder %s143, %s145
    %p149 = scmp.eq.s32.totalorder %s17, 0
    %p150 = por %p148, %p149
    %p151 = scmp.ne.s32.totalorder %s143, %s145
    %p152 = scmp.eq.s32.totalorder %s22, 1
    %p153 = por %p151, %p152
    %p154 = scmp.ne.s32.totalorder %s145, %s146
    %p155 = scmp.eq.s32.totalorder %s22, 0
    %p156 = por %p154, %p155
    %p157 = scmp.ne.s32.totalorder %s145, %s146
    %p158 = scmp.eq.s32.totalorder %s23, 1
    %p159 = por %p157, %p158
    %p161 = scmp.ne.s32.totalorder %s146, %s160
    %p162 = scmp.eq.s32.totalorder %s23, 0
    %p163 = por %p161, %p162
    %s165 = sadd.s32 %s164, 1
    %p168 = scmp.eq.s32.totalorder %s17, 1
    %p169 = scmp.ne.s32.totalorder %s164, %s166
    %p170 = scmp.eq.s32.totalorder %s17, 0
    %p171 = por %p169, %p170
    %p172 = scmp.ne.s32.totalorder %s164, %s166
    %p173 = scmp.eq.s32.totalorder %s22, 1
    %p174 = por %p172, %p173
    %p175 = scmp.ne.s32.totalorder %s166, %s167
    %p176 = scmp.eq.s32.totalorder %s22, 0
    %p177 = por %p175, %p176
    %p178 = scmp.ne.s32.totalorder %s166, %s167
    %p179 = scmp.eq.s32.totalorder %s23, 1
    %p180 = por %p178, %p179
    %p182 = scmp.ne.s32.totalorder %s167, %s181
    %p183 = scmp.eq.s32.totalorder %s23, 0
    %p184 = por %p182, %p183
    %s186 = sadd.s32 %s185, 1
    %p189 = scmp.eq.s32.totalorder %s17, 1
    %p190 = scmp.ne.s32.totalorder %s185, %s187
    %p191 = scmp.eq.s32.totalorder %s17, 0
    %p192 = por %p190, %p191
    %p193 = scmp.ne.s32.totalorder %s185, %s187
    %p194 = scmp.eq.s32.totalorder %s22, 1
    %p195 = por %p193, %p194
    %p196 = scmp.ne.s32.totalorder %s187, %s188
    %p197 = scmp.eq.s32.totalorder %s22, 0
    %p198 = por %p196, %p197
    %p199 = scmp.ne.s32.totalorder %s187, %s188
    %p200 = scmp.eq.s32.totalorder %s23, 1
    %p201 = por %p199, %p200
    %p203 = scmp.ne.s32.totalorder %s188, %s202
    %p204 = scmp.eq.s32.totalorder %s23, 0
    %p205 = por %p203, %p204
    %s207 = sadd.s32 %s206, 1
    %p210 = scmp.eq.s32.totalorder %s17, 1
    %p211 = scmp.ne.s32.totalorder %s206, %s208
    %p212 = scmp.eq.s32.totalorder %s17, 0
    %p213 = por %p211, %p212
    %p214 = scmp.ne.s32.totalorder %s206, %s208
    %p215 = scmp.eq.s32.totalorder %s22, 1
    %p216 = por %p214, %p215
    %p217 = scmp.ne.s32.totalorder %s208, %s209
    %p218 = scmp.eq.s32.totalorder %s22, 0
    %p219 = por %p217, %p218
    %p220 = scmp.ne.s32.totalorder %s208, %s209
    %p221 = scmp.eq.s32.totalorder %s23, 1
    %p222 = por %p220, %p221
    %p224 = scmp.ne.s32.totalorder %s209, %s223
    %p225 = scmp.eq.s32.totalorder %s23, 0
    %p226 = por %p224, %p225
    %s227 = ssub.s32 %s24, %s36
    %s228 = ssub.s32 %s25, %s32
    %s229 = sor.u32 %s227, %s228
    %p230 = scmp.eq.s32.totalorder %s229, 0
    %s232 = sadd.s32 %s231, 1
    %s233 = scalar_select %p230, %s231, %s232
    %p236 = pneg %p230
    %p237 = scmp.eq.s32.totalorder %s17, 1
    %p238 = por %p236, %p237
    %p239 = scmp.ne.s32.totalorder %s231, %s234
    %p240 = scmp.eq.s32.totalorder %s17, 0
    %p241 = por %p239, %p240
    %p242 = scmp.ne.s32.totalorder %s231, %s234
    %p243 = scmp.eq.s32.totalorder %s22, 1
    %p244 = por %p242, %p243
    %p245 = scmp.ne.s32.totalorder %s234, %s235
    %p246 = scmp.eq.s32.totalorder %s22, 0
    %p247 = por %p245, %p246
    %p248 = scmp.ne.s32.totalorder %s234, %s235
    %p249 = scmp.eq.s32.totalorder %s23, 1
    %p250 = por %p248, %p249
    %p252 = scmp.ne.s32.totalorder %s235, %s251
    %p253 = scmp.eq.s32.totalorder %s23, 0
    %p254 = por %p252, %p253
    %s255 = ssub.s32 %s24, %s36
    %s256 = ssub.s32 %s25, %s32
    %s257 = sor.u32 %s255, %s256
    %p258 = scmp.eq.s32.totalorder %s257, 0
    %s260 = sadd.s32 %s259, 1
    %s261 = scalar_select %p258, %s259, %s260
    %p264 = pneg %p258
    %p265 = scmp.eq.s32.totalorder %s17, 1
    %p266 = por %p264, %p265
    %p267 = scmp.ne.s32.totalorder %s259, %s262
    %p268 = scmp.eq.s32.totalorder %s17, 0
    %p269 = por %p267, %p268
    %p270 = scmp.ne.s32.totalorder %s259, %s262
    %p271 = scmp.eq.s32.totalorder %s22, 1
    %p272 = por %p270, %p271
    %p273 = scmp.ne.s32.totalorder %s262, %s263
    %p274 = scmp.eq.s32.totalorder %s22, 0
    %p275 = por %p273, %p274
    %p276 = scmp.ne.s32.totalorder %s262, %s263
    %p277 = scmp.eq.s32.totalorder %s23, 1
    %p278 = por %p276, %p277
    %p280 = scmp.ne.s32.totalorder %s263, %s279
    %p281 = scmp.eq.s32.totalorder %s23, 0
    %p282 = por %p280, %p281
    %p283 = scmp.le.s32.totalorder 1, %s17
    %p284 = scmp.lt.s32.totalorder %s17, 3
    %p285 = pnand %p283, %p284
    %p286 = pneg %p285
    // Predicated region
    $region9: #{tpu_custom_call.1} parent=5 // pred_check
      _
    $region10: #{tpu_custom_call.1} parent=5 // pred_check_branch
      %288 = sbr.rel (%p285) target = $region12
    $region11: #{tpu_custom_call.1} parent=5 // pred_region
      %s289 = ssub.s32 %s17, 1
      // Predicated region
      $region13: #{tpu_custom_call.1} parent=11 // pred_check
        %p290 = pneg %p156
      $region14: #{tpu_custom_call.1} parent=11 // pred_check_branch
        %292 = sbr.rel (%p290) target = $region16
      $region15: #{tpu_custom_call.1} parent=11 // pred_region
        _
      $region16: #{tpu_custom_call.1} parent=11 // pred_fallthru
        _
      // Predicated region
      $region17: #{tpu_custom_call.1} parent=11 // pred_check
        %p293 = pneg %p177
      $region18: #{tpu_custom_call.1} parent=11 // pred_check_branch
        %295 = sbr.rel (%p293) target = $region20
      $region19: #{tpu_custom_call.1} parent=11 // pred_region
        _
      $region20: #{tpu_custom_call.1} parent=11 // pred_fallthru
        _
      // Predicated region
      $region21: #{tpu_custom_call.1} parent=11 // pred_check
        %p296 = pneg %p198
      $region22: #{tpu_custom_call.1} parent=11 // pred_check_branch
        %298 = sbr.rel (%p296) target = $region24
      $region23: #{tpu_custom_call.1} parent=11 // pred_region
        _
      $region24: #{tpu_custom_call.1} parent=11 // pred_fallthru
        _
      // Predicated region
      $region25: #{tpu_custom_call.1} parent=11 // pred_check
        %p299 = pneg %p219
      $region26: #{tpu_custom_call.1} parent=11 // pred_check_branch
        %301 = sbr.rel (%p299) target = $region28
      $region27: #{tpu_custom_call.1} parent=11 // pred_region
        _
      $region28: #{tpu_custom_call.1} parent=11 // pred_fallthru
        _
    $region12: #{tpu_custom_call.1} parent=5 // pred_fallthru
      _
    %p302 = scmp.lt.s32.totalorder %s17, 2
    // Predicated region
    $region29: #{tpu_custom_call.1} parent=5 // pred_check
      %p303 = pneg %p302
    $region30: #{tpu_custom_call.1} parent=5 // pred_check_branch
      %305 = sbr.rel (%p303) target = $region32
    $region31: #{tpu_custom_call.1} parent=5 // pred_region
      // Predicated region
      $region33: #{tpu_custom_call.1} parent=31 // pred_check
        %p306 = pneg %p51
      $region34: #{tpu_custom_call.1} parent=31 // pred_check_branch
        %308 = sbr.rel (%p306) target = $region36
      $region35: #{tpu_custom_call.1} parent=31 // pred_region
        %s309 = smul.u32 32, %s25
        %p310 = scmp.lt.s32.totalorder %s24, 1
        %s311 = scalar_select %p310, %s24, 1
        %p312 = scmp.lt.s32.totalorder %s309, 31
        %s313 = scalar_select %p312, %s309, 31
        %s314 = smul.addr %s311, 32
        %s315 = sadd.s32 %s313, %s314
        %s316 = smul.addr %s315, 8
        %s317 = scalar_lea.vmem %s0, %s316
        %s318 = smul.u32 32, %s25
      $region36: #{tpu_custom_call.1} parent=31 // pred_fallthru
        _
      // Predicated region
      $region37: #{tpu_custom_call.1} parent=31 // pred_check
        %p319 = pneg %p77
      $region38: #{tpu_custom_call.1} parent=31 // pred_check_branch
        %321 = sbr.rel (%p319) target = $region40
      $region39: #{tpu_custom_call.1} parent=31 // pred_region
        %p322 = scmp.lt.s32.totalorder %s24, 1
        %s323 = scalar_select %p322, %s24, 1
        %s324 = smul.addr %s323, 4
        %s325 = scalar_lea.vmem %s1, %s324
      $region40: #{tpu_custom_call.1} parent=31 // pred_fallthru
        _
      // Predicated region
      $region41: #{tpu_custom_call.1} parent=31 // pred_check
        %p326 = pneg %p103
      $region42: #{tpu_custom_call.1} parent=31 // pred_check_branch
        %328 = sbr.rel (%p326) target = $region44
      $region43: #{tpu_custom_call.1} parent=31 // pred_region
        %p329 = scmp.lt.s32.totalorder %s24, 1
        %s330 = scalar_select %p329, %s24, 1
        %s331 = smul.addr %s330, 8
        %s332 = smul.addr %s331, 4
        %s333 = scalar_lea.vmem %s2, %s332
      $region44: #{tpu_custom_call.1} parent=31 // pred_fallthru
        _
      // Predicated region
      $region45: #{tpu_custom_call.1} parent=31 // pred_check
        %p334 = pneg %p129
      $region46: #{tpu_custom_call.1} parent=31 // pred_check_branch
        %336 = sbr.rel (%p334) target = $region48
      $region47: #{tpu_custom_call.1} parent=31 // pred_region
        %p337 = scmp.lt.s32.totalorder %s24, 1
        %s338 = scalar_select %p337, %s24, 1
        %s339 = scalar_lea.vmem %s3, %s338
      $region48: #{tpu_custom_call.1} parent=31 // pred_fallthru
        _
    $region32: #{tpu_custom_call.1} parent=5 // pred_fallthru
      _
    %p340 = scmp.le.s32.totalorder 1, %s17
    %p341 = scmp.lt.s32.totalorder %s17, 3
    %p342 = pnand %p340, %p341
    %p343 = pneg %p342
    // Predicated region
    $region49: #{tpu_custom_call.1} parent=5 // pred_check
      _
    $region50: #{tpu_custom_call.1} parent=5 // pred_check_branch
      %345 = sbr.rel (%p342) target = $region52
    $region51: #{tpu_custom_call.1} parent=5 // pred_region
      %s346 = ssub.s32 %s17, 1
      %s347 = smul.u32 32, %s27
      %p348 = scmp.lt.s32.totalorder %s26, 1
      %s349 = scalar_select %p348, %s26, 1
      %p350 = scmp.lt.s32.totalorder %s347, 31
      %s351 = scalar_select %p350, %s347, 31
      %s352 = smul.addr %s349, 32
      %s353 = sadd.s32 %s351, %s352
      %s354 = smul.addr %s353, 8
      %s355 = scalar_lea.vmem %s0, %s354
      %p356 = pneg %p57
      %p357 = pneg %p54
      %p358 = scmp.lt.s32.totalorder %s26, 1
      %s359 = scalar_select %p358, %s26, 1
      %s360 = smul.addr %s359, 4
      %s361 = scalar_lea.vmem %s1, %s360
      %p362 = pneg %p83
      %p363 = pneg %p80
      %p364 = scmp.lt.s32.totalorder %s26, 1
      %s365 = scalar_select %p364, %s26, 1
      %s366 = smul.addr %s365, 8
      %s367 = smul.addr %s366, 4
      %s368 = scalar_lea.vmem %s2, %s367
      %p369 = pneg %p109
      %p370 = pneg %p106
      %p371 = scmp.lt.s32.totalorder %s26, 1
      %s372 = scalar_select %p371, %s26, 1
      %s373 = scalar_lea.vmem %s3, %s372
      %p374 = pneg %p135
      %p375 = pneg %p132
      %p376 = pneg %p156
      %p377 = pneg %p153
      %p378 = pneg %p177
      %p379 = pneg %p174
      %p380 = pneg %p198
      %p381 = pneg %p195
      %p382 = pneg %p219
      %p383 = pneg %p216
      %p384 = pneg %p247
      %p385 = pneg %p244
      %s386 = smul.u32 32, %s27
      %p387 = scmp.lt.s32.totalorder %s26, 1
      %s388 = scalar_select %p387, %s26, 1
      %p389 = scmp.lt.s32.totalorder %s386, 31
      %s390 = scalar_select %p389, %s386, 31
      %s391 = smul.addr %s388, 32
      %s392 = sadd.s32 %s390, %s391
      %s393 = smul.addr %s392, 8
      %s394 = scalar_lea.vmem %s8, %s393
      %p395 = pneg %p275
      %p396 = pneg %p272
      %s397 = smul.u32 32, %s27
      %p398 = scmp.lt.s32.totalorder %s26, 1
      %s399 = scalar_select %p398, %s26, 1
      %p400 = scmp.lt.s32.totalorder %s397, 31
      %s401 = scalar_select %p400, %s397, 31
      %s402 = smul.addr %s399, 32
      %s403 = sadd.s32 %s401, %s402
      %s404 = smul.addr %s403, 4
      %s405 = scalar_lea.vmem %s9, %s404
      %s406 = smul.u32 32, %s27
      %p407 = scmp.lt.s32.totalorder %s26, 1
      %s408 = scalar_select %p407, %s26, 1
      %p409 = scmp.lt.s32.totalorder %s406, 31
      %s410 = scalar_select %p409, %s406, 31
      %s411 = smul.addr %s408, 32
      %s412 = sadd.s32 %s410, %s411
      %s413 = smul.addr %s412, 8
      %s414 = scalar_lea.vmem %s0, %s413
      %s415 = smul.u32 32, %s27
      %p416 = scmp.lt.s32.totalorder %s26, 1
      %s417 = scalar_select %p416, %s26, 1
      %s418 = smul.addr %s417, 4
      %s419 = scalar_lea.vmem %s1, %s418
      %p420 = scmp.lt.s32.totalorder %s26, 1
      %s421 = scalar_select %p420, %s26, 1
      %s422 = smul.addr %s421, 8
      %s423 = smul.addr %s422, 4
      %s424 = scalar_lea.vmem %s2, %s423
      %p425 = scmp.lt.s32.totalorder %s26, 1
      %s426 = scalar_select %p425, %s26, 1
      %s427 = scalar_lea.vmem %s3, %s426
      %s428 = smul.u32 32, %s27
      %p429 = scmp.lt.s32.totalorder %s26, 1
      %s430 = scalar_select %p429, %s26, 1
      %p431 = scmp.lt.s32.totalorder %s428, 31
      %s432 = scalar_select %p431, %s428, 31
      %s433 = smul.addr %s430, 32
      %s434 = sadd.s32 %s432, %s433
      %s435 = smul.addr %s434, 8
      %s436 = scalar_lea.vmem %s8, %s435
      %s437 = smul.u32 32, %s27
      %s438 = smul.u32 32, %s27
      %p439 = scmp.lt.s32.totalorder %s26, 1
      %s440 = scalar_select %p439, %s26, 1
      %p441 = scmp.lt.s32.totalorder %s438, 31
      %s442 = scalar_select %p441, %s438, 31
      %s443 = smul.addr %s440, 32
      %s444 = sadd.s32 %s442, %s443
      %s445 = smul.addr %s444, 4
      %s446 = scalar_lea.vmem %s9, %s445
      %s447 = smul.u32 32, %s27
      %v449 = vld [vmem:[%s414] sm:$0xff]
      %v450 = vld [vmem:[%s414 + $0x8] sm:$0xff]
      %v451 = vld [vmem:[%s414 + $0x10] sm:$0xff]
      %v452 = vld [vmem:[%s414 + $0x18] sm:$0xff]
      %v453 = vld [vmem:[%s414 + $0x20] sm:$0xff]
      %v454 = vld [vmem:[%s414 + $0x28] sm:$0xff]
      %v455 = vld [vmem:[%s414 + $0x30] sm:$0xff]
      %v456 = vld [vmem:[%s414 + $0x38] sm:$0xff]
      %v457 = vld [vmem:[%s414 + $0x40] sm:$0xff]
      %v458 = vld [vmem:[%s414 + $0x48] sm:$0xff]
      %v459 = vld [vmem:[%s414 + $0x50] sm:$0xff]
      %v460 = vld [vmem:[%s414 + $0x58] sm:$0xff]
      %v461 = vld [vmem:[%s414 + $0x60] sm:$0xff]
      %v462 = vld [vmem:[%s414 + $0x68] sm:$0xff]
      %v463 = vld [vmem:[%s414 + $0x70] sm:$0xff]
      %v464 = vld [vmem:[%s414 + $0x78] sm:$0xff]
      %v465 = vld [vmem:[%s414 + $0x80] sm:$0xff]
      %v466 = vld [vmem:[%s414 + $0x88] sm:$0xff]
      %v467 = vld [vmem:[%s414 + $0x90] sm:$0xff]
      %v468 = vld [vmem:[%s414 + $0x98] sm:$0xff]
      %v469 = vld [vmem:[%s414 + $0xa0] sm:$0xff]
      %v470 = vld [vmem:[%s414 + $0xa8] sm:$0xff]
      %v471 = vld [vmem:[%s414 + $0xb0] sm:$0xff]
      %v472 = vld [vmem:[%s414 + $0xb8] sm:$0xff]
      %v473 = vld [vmem:[%s414 + $0xc0] sm:$0xff]
      %v474 = vld [vmem:[%s414 + $0xc8] sm:$0xff]
      %v475 = vld [vmem:[%s414 + $0xd0] sm:$0xff]
      %v476 = vld [vmem:[%s414 + $0xd8] sm:$0xff]
      %v477 = vld [vmem:[%s414 + $0xe0] sm:$0xff]
      %v478 = vld [vmem:[%s414 + $0xe8] sm:$0xff]
      %v479 = vld [vmem:[%s414 + $0xf0] sm:$0xff]
      %v480 = vld [vmem:[%s414 + $0xf8] sm:$0xff]
      %v481 = vpack.c.bf16 %v450, %v449
      %v482 = vpack.c.bf16 %v452, %v451
      %v483 = vpack.c.bf16 %v454, %v453
      %v484 = vpack.c.bf16 %v456, %v455
      %v485 = vpack.c.bf16 %v458, %v457
      %v486 = vpack.c.bf16 %v460, %v459
      %v487 = vpack.c.bf16 %v462, %v461
      %v488 = vpack.c.bf16 %v464, %v463
      %v489 = vpack.c.bf16 %v466, %v465
      %v490 = vpack.c.bf16 %v468, %v467
      %v491 = vpack.c.bf16 %v470, %v469
      %v492 = vpack.c.bf16 %v472, %v471
      %v493 = vpack.c.bf16 %v474, %v473
      %v494 = vpack.c.bf16 %v476, %v475
      %v495 = vpack.c.bf16 %v478, %v477
      %v496 = vpack.c.bf16 %v480, %v479
      %v497 = vld [vmem:[%s4] sm:$0xf]
      %v498 = vld [vmem:[%s4 + $0x4] sm:$0xf]
      %v499 = vld [vmem:[%s4 + $0x8] sm:$0xf]
      %v500 = vld [vmem:[%s4 + $0xc] sm:$0xf]
      %v501 = vld [vmem:[%s4 + $0x10] sm:$0xf]
      %v502 = vld [vmem:[%s4 + $0x14] sm:$0xf]
      %v503 = vld [vmem:[%s4 + $0x18] sm:$0xf]
      %v504 = vld [vmem:[%s4 + $0x1c] sm:$0xf]
      %v513 = vunpack.c.l.b16 %v497
      %v514 = vunpack.c.l.b16 %v498
      %v515 = vunpack.c.l.b16 %v499
      %v516 = vunpack.c.l.b16 %v500
      %v517 = vunpack.c.l.b16 %v501
      %v518 = vunpack.c.l.b16 %v502
      %v519 = vunpack.c.l.b16 %v503
      %v520 = vunpack.c.l.b16 %v504
      %v521 = vpack.c.b16 %v514, %v513
      %v522 = vpack.c.b16 %v516, %v515
      %v523 = vpack.c.b16 %v518, %v517
      %v524 = vpack.c.b16 %v520, %v519
      %vm529 = vcmask 523264
      %v531 = vsel %vm529, %v481, 0
      %v534 = vsel %vm529, %v482, 0
      %v537 = vsel %vm529, %v483, 0
      %v540 = vsel %vm529, %v484, 0
      %v543 = vsel %vm529, %v485, 0
      %v546 = vsel %vm529, %v486, 0
      %v549 = vsel %vm529, %v487, 0
      %v552 = vsel %vm529, %v488, 0
      %v555 = vsel %vm529, %v489, 0
      %v558 = vsel %vm529, %v490, 0
      %v561 = vsel %vm529, %v491, 0
      %v564 = vsel %vm529, %v492, 0
      %v567 = vsel %vm529, %v493, 0
      %v570 = vsel %vm529, %v494, 0
      %v573 = vsel %vm529, %v495, 0
      %v576 = vsel %vm529, %v496, 0
      %578 = vmatpush.bf16.msra.mxu0 0
      %579 = vmatpush.bf16.msra.mxu0 0
      %580 = vmatpush.bf16.msra.mxu0 0
      %581 = vmatpush.bf16.msra.mxu0 0
      %582 = vmatpush.bf16.msra.mxu0 %v524
      %583 = vmatpush.bf16.msra.mxu0 %v523
      %584 = vmatpush.bf16.msra.mxu0 %v522
      %585 = vmatpush.bf16.msra.mxu0 %v521
      %586 = vmatmul.bf16.gmra.mxu0 %v531
      %v587 = vpop.f32.mrf.mxu0
      %v588 = vadd.f32 0.0, %v587
      %v589 = vpop.f32.mrf.mxu0
      %v590 = vadd.f32 0.0, %v589
      %591 = vmatmul.bf16.gmra.mxu0 %v534
      %v592 = vpop.f32.mrf.mxu0
      %v593 = vadd.f32 0.0, %v592
      %v594 = vpop.f32.mrf.mxu0
      %v595 = vadd.f32 0.0, %v594
      %596 = vmatmul.bf16.gmra.mxu0 %v537
      %v597 = vpop.f32.mrf.mxu0
      %v598 = vadd.f32 0.0, %v597
      %v599 = vpop.f32.mrf.mxu0
      %v600 = vadd.f32 0.0, %v599
      %601 = vmatmul.bf16.gmra.mxu0 %v540
      %v602 = vpop.f32.mrf.mxu0
      %v603 = vadd.f32 0.0, %v602
      %v604 = vpop.f32.mrf.mxu0
      %v605 = vadd.f32 0.0, %v604
      %606 = vmatmul.bf16.gmra.mxu0 %v543
      %v607 = vpop.f32.mrf.mxu0
      %v608 = vadd.f32 0.0, %v607
      %v609 = vpop.f32.mrf.mxu0
      %v610 = vadd.f32 0.0, %v609
      %611 = vmatmul.bf16.gmra.mxu0 %v546
      %v612 = vpop.f32.mrf.mxu0
      %v613 = vadd.f32 0.0, %v612
      %v614 = vpop.f32.mrf.mxu0
      %v615 = vadd.f32 0.0, %v614
      %616 = vmatmul.bf16.gmra.mxu0 %v549
      %v617 = vpop.f32.mrf.mxu0
      %v618 = vadd.f32 0.0, %v617
      %v619 = vpop.f32.mrf.mxu0
      %v620 = vadd.f32 0.0, %v619
      %621 = vmatmul.bf16.gmra.mxu0 %v552
      %v622 = vpop.f32.mrf.mxu0
      %v623 = vadd.f32 0.0, %v622
      %v624 = vpop.f32.mrf.mxu0
      %v625 = vadd.f32 0.0, %v624
      %626 = vmatmul.bf16.gmra.mxu0 %v555
      %v627 = vpop.f32.mrf.mxu0
      %v628 = vadd.f32 0.0, %v627
      %v629 = vpop.f32.mrf.mxu0
      %v630 = vadd.f32 0.0, %v629
      %631 = vmatmul.bf16.gmra.mxu0 %v558
      %v632 = vpop.f32.mrf.mxu0
      %v633 = vadd.f32 0.0, %v632
      %v634 = vpop.f32.mrf.mxu0
      %v635 = vadd.f32 0.0, %v634
      %636 = vmatmul.bf16.gmra.mxu0 %v561
      %v637 = vpop.f32.mrf.mxu0
      %v638 = vadd.f32 0.0, %v637
      %v639 = vpop.f32.mrf.mxu0
      %v640 = vadd.f32 0.0, %v639
      %641 = vmatmul.bf16.gmra.mxu0 %v564
      %v642 = vpop.f32.mrf.mxu0
      %v643 = vadd.f32 0.0, %v642
      %v644 = vpop.f32.mrf.mxu0
      %v645 = vadd.f32 0.0, %v644
      %646 = vmatmul.bf16.gmra.mxu0 %v567
      %v647 = vpop.f32.mrf.mxu0
      %v648 = vadd.f32 0.0, %v647
      %v649 = vpop.f32.mrf.mxu0
      %v650 = vadd.f32 0.0, %v649
      %651 = vmatmul.bf16.gmra.mxu0 %v570
      %v652 = vpop.f32.mrf.mxu0
      %v653 = vadd.f32 0.0, %v652
      %v654 = vpop.f32.mrf.mxu0
      %v655 = vadd.f32 0.0, %v654
      %656 = vmatmul.bf16.gmra.mxu0 %v573
      %v657 = vpop.f32.mrf.mxu0
      %v658 = vadd.f32 0.0, %v657
      %v659 = vpop.f32.mrf.mxu0
      %v660 = vadd.f32 0.0, %v659
      %661 = vmatmul.bf16.gmra.mxu0 %v576
      %v662 = vpop.f32.mrf.mxu0
      %v663 = vadd.f32 0.0, %v662
      %v664 = vpop.f32.mrf.mxu0
      %v665 = vadd.f32 0.0, %v664
      %666 = vdwg.mxu0
      %v667 = vpack.c.bf16 %v590, %v588
      %v668 = vpack.c.bf16 %v595, %v593
      %v669 = vpack.c.bf16 %v600, %v598
      %v670 = vpack.c.bf16 %v605, %v603
      %v671 = vpack.c.bf16 %v610, %v608
      %v672 = vpack.c.bf16 %v615, %v613
      %v673 = vpack.c.bf16 %v620, %v618
      %v674 = vpack.c.bf16 %v625, %v623
      %v675 = vpack.c.bf16 %v630, %v628
      %v676 = vpack.c.bf16 %v635, %v633
      %v677 = vpack.c.bf16 %v640, %v638
      %v678 = vpack.c.bf16 %v645, %v643
      %v679 = vpack.c.bf16 %v650, %v648
      %v680 = vpack.c.bf16 %v655, %v653
      %v681 = vpack.c.bf16 %v660, %v658
      %v682 = vpack.c.bf16 %v665, %v663
      %v683 = vld [vmem:[%s419] sm:$0xf]
      %v684 = vld [vmem:[%s427] sm:$0x1]
      %v686 = vperm.slane %v684, 0
      %vm688 = vcmask 64512
      %v690 = vsel %vm688, %v667, 0
      %v693 = vsel %vm688, %v668, 0
      %v696 = vsel %vm688, %v669, 0
      %v699 = vsel %vm688, %v670, 0
      %v702 = vsel %vm688, %v671, 0
      %v705 = vsel %vm688, %v672, 0
      %v708 = vsel %vm688, %v673, 0
      %v711 = vsel %vm688, %v674, 0
      %v714 = vsel %vm688, %v675, 0
      %v717 = vsel %vm688, %v676, 0
      %v720 = vsel %vm688, %v677, 0
      %v723 = vsel %vm688, %v678, 0
      %v726 = vsel %vm688, %v679, 0
      %v729 = vsel %vm688, %v680, 0
      %v732 = vsel %vm688, %v681, 0
      %v735 = vsel %vm688, %v682, 0
      %vm737 = vcmask 1043456
      %v739 = vsel %vm737, %v683, 0
      %741 = vmatpush.bf16.msra.mxu0 0
      %742 = vmatpush.bf16.msra.mxu0 0
      %743 = vmatpush.bf16.msra.mxu0 0
      %744 = vmatpush.bf16.msra.mxu0 0
      %745 = vmatpush.bf16.msra.mxu0 0
      %746 = vmatpush.bf16.msra.mxu0 0
      %747 = vmatpush.bf16.msra.mxu0 0
      %748 = vmatpush.bf16.msra.mxu0 %v739
      %749 = vmatmul.bf16.gmra.mxu0 %v690
      %v750 = vpop.f32.mrf.mxu0
      %v751 = vadd.f32 %v686, %v750
      %v752 = vpop.f32.mrf.mxu0
      %v753 = vadd.f32 %v686, %v752
      %754 = vmatmul.bf16.gmra.mxu0 %v693
      %v755 = vpop.f32.mrf.mxu0
      %v756 = vadd.f32 %v686, %v755
      %v757 = vpop.f32.mrf.mxu0
      %v758 = vadd.f32 %v686, %v757
      %759 = vmatmul.bf16.gmra.mxu0 %v696
      %v760 = vpop.f32.mrf.mxu0
      %v761 = vadd.f32 %v686, %v760
      %v762 = vpop.f32.mrf.mxu0
      %v763 = vadd.f32 %v686, %v762
      %764 = vmatmul.bf16.gmra.mxu0 %v699
      %v765 = vpop.f32.mrf.mxu0
      %v766 = vadd.f32 %v686, %v765
      %v767 = vpop.f32.mrf.mxu0
      %v768 = vadd.f32 %v686, %v767
      %769 = vmatmul.bf16.gmra.mxu0 %v702
      %v770 = vpop.f32.mrf.mxu0
      %v771 = vadd.f32 %v686, %v770
      %v772 = vpop.f32.mrf.mxu0
      %v773 = vadd.f32 %v686, %v772
      %774 = vmatmul.bf16.gmra.mxu0 %v705
      %v775 = vpop.f32.mrf.mxu0
      %v776 = vadd.f32 %v686, %v775
      %v777 = vpop.f32.mrf.mxu0
      %v778 = vadd.f32 %v686, %v777
      %779 = vmatmul.bf16.gmra.mxu0 %v708
      %v780 = vpop.f32.mrf.mxu0
      %v781 = vadd.f32 %v686, %v780
      %v782 = vpop.f32.mrf.mxu0
      %v783 = vadd.f32 %v686, %v782
      %784 = vmatmul.bf16.gmra.mxu0 %v711
      %v785 = vpop.f32.mrf.mxu0
      %v786 = vadd.f32 %v686, %v785
      %v787 = vpop.f32.mrf.mxu0
      %v788 = vadd.f32 %v686, %v787
      %789 = vmatmul.bf16.gmra.mxu0 %v714
      %v790 = vpop.f32.mrf.mxu0
      %v791 = vadd.f32 %v686, %v790
      %v792 = vpop.f32.mrf.mxu0
      %v793 = vadd.f32 %v686, %v792
      %794 = vmatmul.bf16.gmra.mxu0 %v717
      %v795 = vpop.f32.mrf.mxu0
      %v796 = vadd.f32 %v686, %v795
      %v797 = vpop.f32.mrf.mxu0
      %v798 = vadd.f32 %v686, %v797
      %799 = vmatmul.bf16.gmra.mxu0 %v720
      %v800 = vpop.f32.mrf.mxu0
      %v801 = vadd.f32 %v686, %v800
      %v802 = vpop.f32.mrf.mxu0
      %v803 = vadd.f32 %v686, %v802
      %804 = vmatmul.bf16.gmra.mxu0 %v723
      %v805 = vpop.f32.mrf.mxu0
      %v806 = vadd.f32 %v686, %v805
      %v807 = vpop.f32.mrf.mxu0
      %v808 = vadd.f32 %v686, %v807
      %809 = vmatmul.bf16.gmra.mxu0 %v726
      %v810 = vpop.f32.mrf.mxu0
      %v811 = vadd.f32 %v686, %v810
      %v812 = vpop.f32.mrf.mxu0
      %v813 = vadd.f32 %v686, %v812
      %814 = vmatmul.bf16.gmra.mxu0 %v729
      %v815 = vpop.f32.mrf.mxu0
      %v816 = vadd.f32 %v686, %v815
      %v817 = vpop.f32.mrf.mxu0
      %v818 = vadd.f32 %v686, %v817
      %819 = vmatmul.bf16.gmra.mxu0 %v732
      %v820 = vpop.f32.mrf.mxu0
      %v821 = vadd.f32 %v686, %v820
      %v822 = vpop.f32.mrf.mxu0
      %v823 = vadd.f32 %v686, %v822
      %824 = vmatmul.bf16.gmra.mxu0 %v735
      %v825 = vpop.f32.mrf.mxu0
      %v826 = vadd.f32 %v686, %v825
      %v827 = vpop.f32.mrf.mxu0
      %v828 = vadd.f32 %v686, %v827
      %829 = vdwg.mxu0
      %v830 = vsel %vm529, %v751, -inf
      %831 = vmax.xlane.f32.xlu0 %v830
      %v832 = vpop.xlane.xlu0 %831
      %v833 = vsel %vm529, %v753, -inf
      %834 = vmax.xlane.f32.xlu0 %v833
      %v835 = vpop.xlane.xlu0 %834
      %v836 = vsel %vm529, %v756, -inf
      %837 = vmax.xlane.f32.xlu0 %v836
      %v838 = vpop.xlane.xlu0 %837
      %v839 = vsel %vm529, %v758, -inf
      %840 = vmax.xlane.f32.xlu0 %v839
      %v841 = vpop.xlane.xlu0 %840
      %v842 = vsel %vm529, %v761, -inf
      %843 = vmax.xlane.f32.xlu0 %v842
      %v844 = vpop.xlane.xlu0 %843
      %v845 = vsel %vm529, %v763, -inf
      %846 = vmax.xlane.f32.xlu0 %v845
      %v847 = vpop.xlane.xlu0 %846
      %v848 = vsel %vm529, %v766, -inf
      %849 = vmax.xlane.f32.xlu0 %v848
      %v850 = vpop.xlane.xlu0 %849
      %v851 = vsel %vm529, %v768, -inf
      %852 = vmax.xlane.f32.xlu0 %v851
      %v853 = vpop.xlane.xlu0 %852
      %v854 = vsel %vm529, %v771, -inf
      %855 = vmax.xlane.f32.xlu0 %v854
      %v856 = vpop.xlane.xlu0 %855
      %v857 = vsel %vm529, %v773, -inf
      %858 = vmax.xlane.f32.xlu0 %v857
      %v859 = vpop.xlane.xlu0 %858
      %v860 = vsel %vm529, %v776, -inf
      %861 = vmax.xlane.f32.xlu0 %v860
      %v862 = vpop.xlane.xlu0 %861
      %v863 = vsel %vm529, %v778, -inf
      %864 = vmax.xlane.f32.xlu0 %v863
      %v865 = vpop.xlane.xlu0 %864
      %v866 = vsel %vm529, %v781, -inf
      %867 = vmax.xlane.f32.xlu0 %v866
      %v868 = vpop.xlane.xlu0 %867
      %v869 = vsel %vm529, %v783, -inf
      %870 = vmax.xlane.f32.xlu0 %v869
      %v871 = vpop.xlane.xlu0 %870
      %v872 = vsel %vm529, %v786, -inf
      %873 = vmax.xlane.f32.xlu0 %v872
      %v874 = vpop.xlane.xlu0 %873
      %v875 = vsel %vm529, %v788, -inf
      %876 = vmax.xlane.f32.xlu0 %v875
      %v877 = vpop.xlane.xlu0 %876
      %v878 = vsel %vm529, %v791, -inf
      %879 = vmax.xlane.f32.xlu0 %v878
      %v880 = vpop.xlane.xlu0 %879
      %v881 = vsel %vm529, %v793, -inf
      %882 = vmax.xlane.f32.xlu0 %v881
      %v883 = vpop.xlane.xlu0 %882
      %v884 = vsel %vm529, %v796, -inf
      %885 = vmax.xlane.f32.xlu0 %v884
      %v886 = vpop.xlane.xlu0 %885
      %v887 = vsel %vm529, %v798, -inf
      %888 = vmax.xlane.f32.xlu0 %v887
      %v889 = vpop.xlane.xlu0 %888
      %v890 = vsel %vm529, %v801, -inf
      %891 = vmax.xlane.f32.xlu0 %v890
      %v892 = vpop.xlane.xlu0 %891
      %v893 = vsel %vm529, %v803, -inf
      %894 = vmax.xlane.f32.xlu0 %v893
      %v895 = vpop.xlane.xlu0 %894
      %v896 = vsel %vm529, %v806, -inf
      %897 = vmax.xlane.f32.xlu0 %v896
      %v898 = vpop.xlane.xlu0 %897
      %v899 = vsel %vm529, %v808, -inf
      %900 = vmax.xlane.f32.xlu0 %v899
      %v901 = vpop.xlane.xlu0 %900
      %v902 = vsel %vm529, %v811, -inf
      %903 = vmax.xlane.f32.xlu0 %v902
      %v904 = vpop.xlane.xlu0 %903
      %v905 = vsel %vm529, %v813, -inf
      %906 = vmax.xlane.f32.xlu0 %v905
      %v907 = vpop.xlane.xlu0 %906
      %v908 = vsel %vm529, %v816, -inf
      %909 = vmax.xlane.f32.xlu0 %v908
      %v910 = vpop.xlane.xlu0 %909
      %v911 = vsel %vm529, %v818, -inf
      %912 = vmax.xlane.f32.xlu0 %v911
      %v913 = vpop.xlane.xlu0 %912
      %v914 = vsel %vm529, %v821, -inf
      %915 = vmax.xlane.f32.xlu0 %v914
      %v916 = vpop.xlane.xlu0 %915
      %v917 = vsel %vm529, %v823, -inf
      %918 = vmax.xlane.f32.xlu0 %v917
      %v919 = vpop.xlane.xlu0 %918
      %v920 = vsel %vm529, %v826, -inf
      %921 = vmax.xlane.f32.xlu0 %v920
      %v922 = vpop.xlane.xlu0 %921
      %v923 = vsel %vm529, %v828, -inf
      %924 = vmax.xlane.f32.xlu0 %v923
      %v925 = vpop.xlane.xlu0 %924
      %v926 = vsub.f32 %v751, %v832
      %v927 = vsub.f32 %v753, %v835
      %v928 = vsub.f32 %v756, %v838
      %v929 = vsub.f32 %v758, %v841
      %v930 = vsub.f32 %v761, %v844
      %v931 = vsub.f32 %v763, %v847
      %v932 = vsub.f32 %v766, %v850
      %v933 = vsub.f32 %v768, %v853
      %v934 = vsub.f32 %v771, %v856
      %v935 = vsub.f32 %v773, %v859
      %v936 = vsub.f32 %v776, %v862
      %v937 = vsub.f32 %v778, %v865
      %v938 = vsub.f32 %v781, %v868
      %v939 = vsub.f32 %v783, %v871
      %v940 = vsub.f32 %v786, %v874
      %v941 = vsub.f32 %v788, %v877
      %v942 = vsub.f32 %v791, %v880
      %v943 = vsub.f32 %v793, %v883
      %v944 = vsub.f32 %v796, %v886
      %v945 = vsub.f32 %v798, %v889
      %v946 = vsub.f32 %v801, %v892
      %v947 = vsub.f32 %v803, %v895
      %v948 = vsub.f32 %v806, %v898
      %v949 = vsub.f32 %v808, %v901
      %v950 = vsub.f32 %v811, %v904
      %v951 = vsub.f32 %v813, %v907
      %v952 = vsub.f32 %v816, %v910
      %v953 = vsub.f32 %v818, %v913
      %v954 = vsub.f32 %v821, %v916
      %v955 = vsub.f32 %v823, %v919
      %v956 = vsub.f32 %v826, %v922
      %v957 = vsub.f32 %v828, %v925
      %v958 = vmul.f32 %v926, 1.442695
      %v959 = vpow.pop %v958
      %v960 = vmul.f32 %v927, 1.442695
      %v961 = vpow.pop %v960
      %v962 = vmul.f32 %v928, 1.442695
      %v963 = vpow.pop %v962
      %v964 = vmul.f32 %v929, 1.442695
      %v965 = vpow.pop %v964
      %v966 = vmul.f32 %v930, 1.442695
      %v967 = vpow.pop %v966
      %v968 = vmul.f32 %v931, 1.442695
      %v969 = vpow.pop %v968
      %v970 = vmul.f32 %v932, 1.442695
      %v971 = vpow.pop %v970
      %v972 = vmul.f32 %v933, 1.442695
      %v973 = vpow.pop %v972
      %v974 = vmul.f32 %v934, 1.442695
      %v975 = vpow.pop %v974
      %v976 = vmul.f32 %v935, 1.442695
      %v977 = vpow.pop %v976
      %v978 = vmul.f32 %v936, 1.442695
      %v979 = vpow.pop %v978
      %v980 = vmul.f32 %v937, 1.442695
      %v981 = vpow.pop %v980
      %v982 = vmul.f32 %v938, 1.442695
      %v983 = vpow.pop %v982
      %v984 = vmul.f32 %v939, 1.442695
      %v985 = vpow.pop %v984
      %v986 = vmul.f32 %v940, 1.442695
      %v987 = vpow.pop %v986
      %v988 = vmul.f32 %v941, 1.442695
      %v989 = vpow.pop %v988
      %v990 = vmul.f32 %v942, 1.442695
      %v991 = vpow.pop %v990
      %v992 = vmul.f32 %v943, 1.442695
      %v993 = vpow.pop %v992
      %v994 = vmul.f32 %v944, 1.442695
      %v995 = vpow.pop %v994
      %v996 = vmul.f32 %v945, 1.442695
      %v997 = vpow.pop %v996
      %v998 = vmul.f32 %v946, 1.442695
      %v999 = vpow.pop %v998
      %v1000 = vmul.f32 %v947, 1.442695
      %v1001 = vpow.pop %v1000
      %v1002 = vmul.f32 %v948, 1.442695
      %v1003 = vpow.pop %v1002
      %v1004 = vmul.f32 %v949, 1.442695
      %v1005 = vpow.pop %v1004
      %v1006 = vmul.f32 %v950, 1.442695
      %v1007 = vpow.pop %v1006
      %v1008 = vmul.f32 %v951, 1.442695
      %v1009 = vpow.pop %v1008
      %v1010 = vmul.f32 %v952, 1.442695
      %v1011 = vpow.pop %v1010
      %v1012 = vmul.f32 %v953, 1.442695
      %v1013 = vpow.pop %v1012
      %v1014 = vmul.f32 %v954, 1.442695
      %v1015 = vpow.pop %v1014
      %v1016 = vmul.f32 %v955, 1.442695
      %v1017 = vpow.pop %v1016
      %v1018 = vmul.f32 %v956, 1.442695
      %v1019 = vpow.pop %v1018
      %v1020 = vmul.f32 %v957, 1.442695
      %v1021 = vpow.pop %v1020
      %v1022 = vsel %vm529, %v959, 0.0
      %1023 = vadd.xlane.f32.xlu0 %v1022
      %v1024 = vpop.xlane.xlu0 %1023
      %v1025 = vsel %vm529, %v961, 0.0
      %1026 = vadd.xlane.f32.xlu0 %v1025
      %v1027 = vpop.xlane.xlu0 %1026
      %v1028 = vsel %vm529, %v963, 0.0
      %1029 = vadd.xlane.f32.xlu0 %v1028
      %v1030 = vpop.xlane.xlu0 %1029
      %v1031 = vsel %vm529, %v965, 0.0
      %1032 = vadd.xlane.f32.xlu0 %v1031
      %v1033 = vpop.xlane.xlu0 %1032
      %v1034 = vsel %vm529, %v967, 0.0
      %1035 = vadd.xlane.f32.xlu0 %v1034
      %v1036 = vpop.xlane.xlu0 %1035
      %v1037 = vsel %vm529, %v969, 0.0
      %1038 = vadd.xlane.f32.xlu0 %v1037
      %v1039 = vpop.xlane.xlu0 %1038
      %v1040 = vsel %vm529, %v971, 0.0
      %1041 = vadd.xlane.f32.xlu0 %v1040
      %v1042 = vpop.xlane.xlu0 %1041
      %v1043 = vsel %vm529, %v973, 0.0
      %1044 = vadd.xlane.f32.xlu0 %v1043
      %v1045 = vpop.xlane.xlu0 %1044
      %v1046 = vsel %vm529, %v975, 0.0
      %1047 = vadd.xlane.f32.xlu0 %v1046
      %v1048 = vpop.xlane.xlu0 %1047
      %v1049 = vsel %vm529, %v977, 0.0
      %1050 = vadd.xlane.f32.xlu0 %v1049
      %v1051 = vpop.xlane.xlu0 %1050
      %v1052 = vsel %vm529, %v979, 0.0
      %1053 = vadd.xlane.f32.xlu0 %v1052
      %v1054 = vpop.xlane.xlu0 %1053
      %v1055 = vsel %vm529, %v981, 0.0
      %1056 = vadd.xlane.f32.xlu0 %v1055
      %v1057 = vpop.xlane.xlu0 %1056
      %v1058 = vsel %vm529, %v983, 0.0
      %1059 = vadd.xlane.f32.xlu0 %v1058
      %v1060 = vpop.xlane.xlu0 %1059
      %v1061 = vsel %vm529, %v985, 0.0
      %1062 = vadd.xlane.f32.xlu0 %v1061
      %v1063 = vpop.xlane.xlu0 %1062
      %v1064 = vsel %vm529, %v987, 0.0
      %1065 = vadd.xlane.f32.xlu0 %v1064
      %v1066 = vpop.xlane.xlu0 %1065
      %v1067 = vsel %vm529, %v989, 0.0
      %1068 = vadd.xlane.f32.xlu0 %v1067
      %v1069 = vpop.xlane.xlu0 %1068
      %v1070 = vsel %vm529, %v991, 0.0
      %1071 = vadd.xlane.f32.xlu0 %v1070
      %v1072 = vpop.xlane.xlu0 %1071
      %v1073 = vsel %vm529, %v993, 0.0
      %1074 = vadd.xlane.f32.xlu0 %v1073
      %v1075 = vpop.xlane.xlu0 %1074
      %v1076 = vsel %vm529, %v995, 0.0
      %1077 = vadd.xlane.f32.xlu0 %v1076
      %v1078 = vpop.xlane.xlu0 %1077
      %v1079 = vsel %vm529, %v997, 0.0
      %1080 = vadd.xlane.f32.xlu0 %v1079
      %v1081 = vpop.xlane.xlu0 %1080
      %v1082 = vsel %vm529, %v999, 0.0
      %1083 = vadd.xlane.f32.xlu0 %v1082
      %v1084 = vpop.xlane.xlu0 %1083
      %v1085 = vsel %vm529, %v1001, 0.0
      %1086 = vadd.xlane.f32.xlu0 %v1085
      %v1087 = vpop.xlane.xlu0 %1086
      %v1088 = vsel %vm529, %v1003, 0.0
      %1089 = vadd.xlane.f32.xlu0 %v1088
      %v1090 = vpop.xlane.xlu0 %1089
      %v1091 = vsel %vm529, %v1005, 0.0
      %1092 = vadd.xlane.f32.xlu0 %v1091
      %v1093 = vpop.xlane.xlu0 %1092
      %v1094 = vsel %vm529, %v1007, 0.0
      %1095 = vadd.xlane.f32.xlu0 %v1094
      %v1096 = vpop.xlane.xlu0 %1095
      %v1097 = vsel %vm529, %v1009, 0.0
      %1098 = vadd.xlane.f32.xlu0 %v1097
      %v1099 = vpop.xlane.xlu0 %1098
      %v1100 = vsel %vm529, %v1011, 0.0
      %1101 = vadd.xlane.f32.xlu0 %v1100
      %v1102 = vpop.xlane.xlu0 %1101
      %v1103 = vsel %vm529, %v1013, 0.0
      %1104 = vadd.xlane.f32.xlu0 %v1103
      %v1105 = vpop.xlane.xlu0 %1104
      %v1106 = vsel %vm529, %v1015, 0.0
      %1107 = vadd.xlane.f32.xlu0 %v1106
      %v1108 = vpop.xlane.xlu0 %1107
      %v1109 = vsel %vm529, %v1017, 0.0
      %1110 = vadd.xlane.f32.xlu0 %v1109
      %v1111 = vpop.xlane.xlu0 %1110
      %v1112 = vsel %vm529, %v1019, 0.0
      %1113 = vadd.xlane.f32.xlu0 %v1112
      %v1114 = vpop.xlane.xlu0 %1113
      %v1115 = vsel %vm529, %v1021, 0.0
      %1116 = vadd.xlane.f32.xlu0 %v1115
      %v1117 = vpop.xlane.xlu0 %1116
      %v1118 = vrcp.pop %v1024
      %v1119 = vrcp.pop %v1027
      %v1120 = vrcp.pop %v1030
      %v1121 = vrcp.pop %v1033
      %v1122 = vrcp.pop %v1036
      %v1123 = vrcp.pop %v1039
      %v1124 = vrcp.pop %v1042
      %v1125 = vrcp.pop %v1045
      %v1126 = vrcp.pop %v1048
      %v1127 = vrcp.pop %v1051
      %v1128 = vrcp.pop %v1054
      %v1129 = vrcp.pop %v1057
      %v1130 = vrcp.pop %v1060
      %v1131 = vrcp.pop %v1063
      %v1132 = vrcp.pop %v1066
      %v1133 = vrcp.pop %v1069
      %v1134 = vrcp.pop %v1072
      %v1135 = vrcp.pop %v1075
      %v1136 = vrcp.pop %v1078
      %v1137 = vrcp.pop %v1081
      %v1138 = vrcp.pop %v1084
      %v1139 = vrcp.pop %v1087
      %v1140 = vrcp.pop %v1090
      %v1141 = vrcp.pop %v1093
      %v1142 = vrcp.pop %v1096
      %v1143 = vrcp.pop %v1099
      %v1144 = vrcp.pop %v1102
      %v1145 = vrcp.pop %v1105
      %v1146 = vrcp.pop %v1108
      %v1147 = vrcp.pop %v1111
      %v1148 = vrcp.pop %v1114
      %v1149 = vrcp.pop %v1117
      %v1150 = vmul.f32 %v959, %v1118
      %v1151 = vmul.f32 %v961, %v1119
      %v1152 = vmul.f32 %v963, %v1120
      %v1153 = vmul.f32 %v965, %v1121
      %v1154 = vmul.f32 %v967, %v1122
      %v1155 = vmul.f32 %v969, %v1123
      %v1156 = vmul.f32 %v971, %v1124
      %v1157 = vmul.f32 %v973, %v1125
      %v1158 = vmul.f32 %v975, %v1126
      %v1159 = vmul.f32 %v977, %v1127
      %v1160 = vmul.f32 %v979, %v1128
      %v1161 = vmul.f32 %v981, %v1129
      %v1162 = vmul.f32 %v983, %v1130
      %v1163 = vmul.f32 %v985, %v1131
      %v1164 = vmul.f32 %v987, %v1132
      %v1165 = vmul.f32 %v989, %v1133
      %v1166 = vmul.f32 %v991, %v1134
      %v1167 = vmul.f32 %v993, %v1135
      %v1168 = vmul.f32 %v995, %v1136
      %v1169 = vmul.f32 %v997, %v1137
      %v1170 = vmul.f32 %v999, %v1138
      %v1171 = vmul.f32 %v1001, %v1139
      %v1172 = vmul.f32 %v1003, %v1140
      %v1173 = vmul.f32 %v1005, %v1141
      %v1174 = vmul.f32 %v1007, %v1142
      %v1175 = vmul.f32 %v1009, %v1143
      %v1176 = vmul.f32 %v1011, %v1144
      %v1177 = vmul.f32 %v1013, %v1145
      %v1178 = vmul.f32 %v1015, %v1146
      %v1179 = vmul.f32 %v1017, %v1147
      %v1180 = vmul.f32 %v1019, %v1148
      %v1181 = vmul.f32 %v1021, %v1149
      %v1182 = vpack.c.bf16 %v1150, %v1150
      %v1183 = vpack.c.bf16 %v1151, %v1151
      %v1184 = vpack.c.bf16 %v1152, %v1152
      %v1185 = vpack.c.bf16 %v1153, %v1153
      %v1186 = vpack.c.bf16 %v1154, %v1154
      %v1187 = vpack.c.bf16 %v1155, %v1155
      %v1188 = vpack.c.bf16 %v1156, %v1156
      %v1189 = vpack.c.bf16 %v1157, %v1157
      %v1190 = vpack.c.bf16 %v1158, %v1158
      %v1191 = vpack.c.bf16 %v1159, %v1159
      %v1192 = vpack.c.bf16 %v1160, %v1160
      %v1193 = vpack.c.bf16 %v1161, %v1161
      %v1194 = vpack.c.bf16 %v1162, %v1162
      %v1195 = vpack.c.bf16 %v1163, %v1163
      %v1196 = vpack.c.bf16 %v1164, %v1164
      %v1197 = vpack.c.bf16 %v1165, %v1165
      %v1198 = vpack.c.bf16 %v1166, %v1166
      %v1199 = vpack.c.bf16 %v1167, %v1167
      %v1200 = vpack.c.bf16 %v1168, %v1168
      %v1201 = vpack.c.bf16 %v1169, %v1169
      %v1202 = vpack.c.bf16 %v1170, %v1170
      %v1203 = vpack.c.bf16 %v1171, %v1171
      %v1204 = vpack.c.bf16 %v1172, %v1172
      %v1205 = vpack.c.bf16 %v1173, %v1173
      %v1206 = vpack.c.bf16 %v1174, %v1174
      %v1207 = vpack.c.bf16 %v1175, %v1175
      %v1208 = vpack.c.bf16 %v1176, %v1176
      %v1209 = vpack.c.bf16 %v1177, %v1177
      %v1210 = vpack.c.bf16 %v1178, %v1178
      %v1211 = vpack.c.bf16 %v1179, %v1179
      %v1212 = vpack.c.bf16 %v1180, %v1180
      %v1213 = vpack.c.bf16 %v1181, %v1181
      %vm1214 = vcmask 519168
      %1215 = vst.msk [vmem:[%s446] sm:$0xf] %vm1214, %v1182
      %1216 = vst.msk [vmem:[%s446 + $0x4] sm:$0xf] %vm1214, %v1183
      %1217 = vst.msk [vmem:[%s446 + $0x8] sm:$0xf] %vm1214, %v1184
      %1218 = vst.msk [vmem:[%s446 + $0xc] sm:$0xf] %vm1214, %v1185
      %1219 = vst.msk [vmem:[%s446 + $0x10] sm:$0xf] %vm1214, %v1186
      %1220 = vst.msk [vmem:[%s446 + $0x14] sm:$0xf] %vm1214, %v1187
      %1221 = vst.msk [vmem:[%s446 + $0x18] sm:$0xf] %vm1214, %v1188
      %1222 = vst.msk [vmem:[%s446 + $0x1c] sm:$0xf] %vm1214, %v1189
      %1223 = vst.msk [vmem:[%s446 + $0x20] sm:$0xf] %vm1214, %v1190
      %1224 = vst.msk [vmem:[%s446 + $0x24] sm:$0xf] %vm1214, %v1191
      %1225 = vst.msk [vmem:[%s446 + $0x28] sm:$0xf] %vm1214, %v1192
      %1226 = vst.msk [vmem:[%s446 + $0x2c] sm:$0xf] %vm1214, %v1193
      %1227 = vst.msk [vmem:[%s446 + $0x30] sm:$0xf] %vm1214, %v1194
      %1228 = vst.msk [vmem:[%s446 + $0x34] sm:$0xf] %vm1214, %v1195
      %1229 = vst.msk [vmem:[%s446 + $0x38] sm:$0xf] %vm1214, %v1196
      %1230 = vst.msk [vmem:[%s446 + $0x3c] sm:$0xf] %vm1214, %v1197
      %1231 = vst.msk [vmem:[%s446 + $0x40] sm:$0xf] %vm1214, %v1198
      %1232 = vst.msk [vmem:[%s446 + $0x44] sm:$0xf] %vm1214, %v1199
      %1233 = vst.msk [vmem:[%s446 + $0x48] sm:$0xf] %vm1214, %v1200
      %1234 = vst.msk [vmem:[%s446 + $0x4c] sm:$0xf] %vm1214, %v1201
      %1235 = vst.msk [vmem:[%s446 + $0x50] sm:$0xf] %vm1214, %v1202
      %1236 = vst.msk [vmem:[%s446 + $0x54] sm:$0xf] %vm1214, %v1203
      %1237 = vst.msk [vmem:[%s446 + $0x58] sm:$0xf] %vm1214, %v1204
      %1238 = vst.msk [vmem:[%s446 + $0x5c] sm:$0xf] %vm1214, %v1205
      %1239 = vst.msk [vmem:[%s446 + $0x60] sm:$0xf] %vm1214, %v1206
      %1240 = vst.msk [vmem:[%s446 + $0x64] sm:$0xf] %vm1214, %v1207
      %1241 = vst.msk [vmem:[%s446 + $0x68] sm:$0xf] %vm1214, %v1208
      %1242 = vst.msk [vmem:[%s446 + $0x6c] sm:$0xf] %vm1214, %v1209
      %1243 = vst.msk [vmem:[%s446 + $0x70] sm:$0xf] %vm1214, %v1210
      %1244 = vst.msk [vmem:[%s446 + $0x74] sm:$0xf] %vm1214, %v1211
      %1245 = vst.msk [vmem:[%s446 + $0x78] sm:$0xf] %vm1214, %v1212
      %1246 = vst.msk [vmem:[%s446 + $0x7c] sm:$0xf] %vm1214, %v1213
      %v1247 = vld [vmem:[%s424] sm:$0xf]
      %v1248 = vld [vmem:[%s424 + $0x4] sm:$0xf]
      %v1249 = vld [vmem:[%s424 + $0x8] sm:$0xf]
      %v1250 = vld [vmem:[%s424 + $0xc] sm:$0xf]
      %v1251 = vld [vmem:[%s424 + $0x10] sm:$0xf]
      %v1252 = vld [vmem:[%s424 + $0x14] sm:$0xf]
      %v1253 = vld [vmem:[%s424 + $0x18] sm:$0xf]
      %v1254 = vld [vmem:[%s424 + $0x1c] sm:$0xf]
      %v1287 = vunpack.c.l.b16 %v1182
      %v1288 = vunpack.c.l.b16 %v1183
      %v1289 = vunpack.c.l.b16 %v1184
      %v1290 = vunpack.c.l.b16 %v1185
      %v1291 = vunpack.c.l.b16 %v1186
      %v1292 = vunpack.c.l.b16 %v1187
      %v1293 = vunpack.c.l.b16 %v1188
      %v1294 = vunpack.c.l.b16 %v1189
      %v1295 = vunpack.c.l.b16 %v1190
      %v1296 = vunpack.c.l.b16 %v1191
      %v1297 = vunpack.c.l.b16 %v1192
      %v1298 = vunpack.c.l.b16 %v1193
      %v1299 = vunpack.c.l.b16 %v1194
      %v1300 = vunpack.c.l.b16 %v1195
      %v1301 = vunpack.c.l.b16 %v1196
      %v1302 = vunpack.c.l.b16 %v1197
      %v1303 = vunpack.c.l.b16 %v1198
      %v1304 = vunpack.c.l.b16 %v1199
      %v1305 = vunpack.c.l.b16 %v1200
      %v1306 = vunpack.c.l.b16 %v1201
      %v1307 = vunpack.c.l.b16 %v1202
      %v1308 = vunpack.c.l.b16 %v1203
      %v1309 = vunpack.c.l.b16 %v1204
      %v1310 = vunpack.c.l.b16 %v1205
      %v1311 = vunpack.c.l.b16 %v1206
      %v1312 = vunpack.c.l.b16 %v1207
      %v1313 = vunpack.c.l.b16 %v1208
      %v1314 = vunpack.c.l.b16 %v1209
      %v1315 = vunpack.c.l.b16 %v1210
      %v1316 = vunpack.c.l.b16 %v1211
      %v1317 = vunpack.c.l.b16 %v1212
      %v1318 = vunpack.c.l.b16 %v1213
      %v1319 = vpack.c.b16 %v1288, %v1287
      %v1320 = vpack.c.b16 %v1290, %v1289
      %v1321 = vpack.c.b16 %v1292, %v1291
      %v1322 = vpack.c.b16 %v1294, %v1293
      %v1323 = vpack.c.b16 %v1296, %v1295
      %v1324 = vpack.c.b16 %v1298, %v1297
      %v1325 = vpack.c.b16 %v1300, %v1299
      %v1326 = vpack.c.b16 %v1302, %v1301
      %v1327 = vpack.c.b16 %v1304, %v1303
      %v1328 = vpack.c.b16 %v1306, %v1305
      %v1329 = vpack.c.b16 %v1308, %v1307
      %v1330 = vpack.c.b16 %v1310, %v1309
      %v1331 = vpack.c.b16 %v1312, %v1311
      %v1332 = vpack.c.b16 %v1314, %v1313
      %v1333 = vpack.c.b16 %v1316, %v1315
      %v1334 = vpack.c.b16 %v1318, %v1317
      %v1343 = vunpack.c.l.b16 %v1247
      %v1344 = vunpack.c.l.b16 %v1248
      %v1345 = vunpack.c.l.b16 %v1249
      %v1346 = vunpack.c.l.b16 %v1250
      %v1347 = vunpack.c.l.b16 %v1251
      %v1348 = vunpack.c.l.b16 %v1252
      %v1349 = vunpack.c.l.b16 %v1253
      %v1350 = vunpack.c.l.b16 %v1254
      %v1351 = vpack.c.b16 %v1344, %v1343
      %v1352 = vpack.c.b16 %v1346, %v1345
      %v1353 = vpack.c.b16 %v1348, %v1347
      %v1354 = vpack.c.b16 %v1350, %v1349
      %v1360 = vsel %vm529, %v1319, 0
      %v1363 = vsel %vm529, %v1320, 0
      %v1366 = vsel %vm529, %v1321, 0
      %v1369 = vsel %vm529, %v1322, 0
      %v1372 = vsel %vm529, %v1323, 0
      %v1375 = vsel %vm529, %v1324, 0
      %v1378 = vsel %vm529, %v1325, 0
      %v1381 = vsel %vm529, %v1326, 0
      %v1384 = vsel %vm529, %v1327, 0
      %v1387 = vsel %vm529, %v1328, 0
      %v1390 = vsel %vm529, %v1329, 0
      %v1393 = vsel %vm529, %v1330, 0
      %v1396 = vsel %vm529, %v1331, 0
      %v1399 = vsel %vm529, %v1332, 0
      %v1402 = vsel %vm529, %v1333, 0
      %v1405 = vsel %vm529, %v1334, 0
      %1407 = vmatpush.bf16.msra.mxu0 0
      %1408 = vmatpush.bf16.msra.mxu0 0
      %1409 = vmatpush.bf16.msra.mxu0 0
      %1410 = vmatpush.bf16.msra.mxu0 0
      %1411 = vmatpush.bf16.msra.mxu0 %v1354
      %1412 = vmatpush.bf16.msra.mxu0 %v1353
      %1413 = vmatpush.bf16.msra.mxu0 %v1352
      %1414 = vmatpush.bf16.msra.mxu0 %v1351
      %1415 = vmatmul.bf16.gmra.mxu0 %v1360
      %v1416 = vpop.f32.mrf.mxu0
      %v1417 = vadd.f32 0.0, %v1416
      %v1418 = vpop.f32.mrf.mxu0
      %v1419 = vadd.f32 0.0, %v1418
      %1420 = vmatmul.bf16.gmra.mxu0 %v1363
      %v1421 = vpop.f32.mrf.mxu0
      %v1422 = vadd.f32 0.0, %v1421
      %v1423 = vpop.f32.mrf.mxu0
      %v1424 = vadd.f32 0.0, %v1423
      %1425 = vmatmul.bf16.gmra.mxu0 %v1366
      %v1426 = vpop.f32.mrf.mxu0
      %v1427 = vadd.f32 0.0, %v1426
      %v1428 = vpop.f32.mrf.mxu0
      %v1429 = vadd.f32 0.0, %v1428
      %1430 = vmatmul.bf16.gmra.mxu0 %v1369
      %v1431 = vpop.f32.mrf.mxu0
      %v1432 = vadd.f32 0.0, %v1431
      %v1433 = vpop.f32.mrf.mxu0
      %v1434 = vadd.f32 0.0, %v1433
      %1435 = vmatmul.bf16.gmra.mxu0 %v1372
      %v1436 = vpop.f32.mrf.mxu0
      %v1437 = vadd.f32 0.0, %v1436
      %v1438 = vpop.f32.mrf.mxu0
      %v1439 = vadd.f32 0.0, %v1438
      %1440 = vmatmul.bf16.gmra.mxu0 %v1375
      %v1441 = vpop.f32.mrf.mxu0
      %v1442 = vadd.f32 0.0, %v1441
      %v1443 = vpop.f32.mrf.mxu0
      %v1444 = vadd.f32 0.0, %v1443
      %1445 = vmatmul.bf16.gmra.mxu0 %v1378
      %v1446 = vpop.f32.mrf.mxu0
      %v1447 = vadd.f32 0.0, %v1446
      %v1448 = vpop.f32.mrf.mxu0
      %v1449 = vadd.f32 0.0, %v1448
      %1450 = vmatmul.bf16.gmra.mxu0 %v1381
      %v1451 = vpop.f32.mrf.mxu0
      %v1452 = vadd.f32 0.0, %v1451
      %v1453 = vpop.f32.mrf.mxu0
      %v1454 = vadd.f32 0.0, %v1453
      %1455 = vmatmul.bf16.gmra.mxu0 %v1384
      %v1456 = vpop.f32.mrf.mxu0
      %v1457 = vadd.f32 0.0, %v1456
      %v1458 = vpop.f32.mrf.mxu0
      %v1459 = vadd.f32 0.0, %v1458
      %1460 = vmatmul.bf16.gmra.mxu0 %v1387
      %v1461 = vpop.f32.mrf.mxu0
      %v1462 = vadd.f32 0.0, %v1461
      %v1463 = vpop.f32.mrf.mxu0
      %v1464 = vadd.f32 0.0, %v1463
      %1465 = vmatmul.bf16.gmra.mxu0 %v1390
      %v1466 = vpop.f32.mrf.mxu0
      %v1467 = vadd.f32 0.0, %v1466
      %v1468 = vpop.f32.mrf.mxu0
      %v1469 = vadd.f32 0.0, %v1468
      %1470 = vmatmul.bf16.gmra.mxu0 %v1393
      %v1471 = vpop.f32.mrf.mxu0
      %v1472 = vadd.f32 0.0, %v1471
      %v1473 = vpop.f32.mrf.mxu0
      %v1474 = vadd.f32 0.0, %v1473
      %1475 = vmatmul.bf16.gmra.mxu0 %v1396
      %v1476 = vpop.f32.mrf.mxu0
      %v1477 = vadd.f32 0.0, %v1476
      %v1478 = vpop.f32.mrf.mxu0
      %v1479 = vadd.f32 0.0, %v1478
      %1480 = vmatmul.bf16.gmra.mxu0 %v1399
      %v1481 = vpop.f32.mrf.mxu0
      %v1482 = vadd.f32 0.0, %v1481
      %v1483 = vpop.f32.mrf.mxu0
      %v1484 = vadd.f32 0.0, %v1483
      %1485 = vmatmul.bf16.gmra.mxu0 %v1402
      %v1486 = vpop.f32.mrf.mxu0
      %v1487 = vadd.f32 0.0, %v1486
      %v1488 = vpop.f32.mrf.mxu0
      %v1489 = vadd.f32 0.0, %v1488
      %1490 = vmatmul.bf16.gmra.mxu0 %v1405
      %v1491 = vpop.f32.mrf.mxu0
      %v1492 = vadd.f32 0.0, %v1491
      %v1493 = vpop.f32.mrf.mxu0
      %v1494 = vadd.f32 0.0, %v1493
      %1495 = vdwg.mxu0
      %v1496 = vpack.c.bf16 %v1419, %v1417
      %v1497 = vpack.c.bf16 %v1424, %v1422
      %v1498 = vpack.c.bf16 %v1429, %v1427
      %v1499 = vpack.c.bf16 %v1434, %v1432
      %v1500 = vpack.c.bf16 %v1439, %v1437
      %v1501 = vpack.c.bf16 %v1444, %v1442
      %v1502 = vpack.c.bf16 %v1449, %v1447
      %v1503 = vpack.c.bf16 %v1454, %v1452
      %v1504 = vpack.c.bf16 %v1459, %v1457
      %v1505 = vpack.c.bf16 %v1464, %v1462
      %v1506 = vpack.c.bf16 %v1469, %v1467
      %v1507 = vpack.c.bf16 %v1474, %v1472
      %v1508 = vpack.c.bf16 %v1479, %v1477
      %v1509 = vpack.c.bf16 %v1484, %v1482
      %v1510 = vpack.c.bf16 %v1489, %v1487
      %v1511 = vpack.c.bf16 %v1494, %v1492
      %v1512 = vld [vmem:[%s5] sm:$0xf]
      %v1513 = vld [vmem:[%s5 + $0x4] sm:$0xf]
      %v1514 = vld [vmem:[%s5 + $0x8] sm:$0xf]
      %v1515 = vld [vmem:[%s5 + $0xc] sm:$0xf]
      %v1516 = vld [vmem:[%s6] sm:$0x1]
      %v1518 = vperm.slane %v1516, 0
      %v1524 = vunpack.c.l.b16 %v1512
      %v1525 = vunpack.c.l.b16 %v1513
      %v1526 = vunpack.c.l.b16 %v1514
      %v1527 = vunpack.c.l.b16 %v1515
      %v1528 = vpack.c.b16 %v1525, %v1524
      %v1529 = vpack.c.b16 %v1527, %v1526
      %vm1532 = vcmask 261120
      %v1534 = vsel %vm1532, %v1496, 0
      %v1537 = vsel %vm1532, %v1497, 0
      %v1540 = vsel %vm1532, %v1498, 0
      %v1543 = vsel %vm1532, %v1499, 0
      %v1546 = vsel %vm1532, %v1500, 0
      %v1549 = vsel %vm1532, %v1501, 0
      %v1552 = vsel %vm1532, %v1502, 0
      %v1555 = vsel %vm1532, %v1503, 0
      %v1558 = vsel %vm1532, %v1504, 0
      %v1561 = vsel %vm1532, %v1505, 0
      %v1564 = vsel %vm1532, %v1506, 0
      %v1567 = vsel %vm1532, %v1507, 0
      %v1570 = vsel %vm1532, %v1508, 0
      %v1573 = vsel %vm1532, %v1509, 0
      %v1576 = vsel %vm1532, %v1510, 0
      %v1579 = vsel %vm1532, %v1511, 0
      %1581 = vmatpush.bf16.msra.mxu0 0
      %1582 = vmatpush.bf16.msra.mxu0 0
      %1583 = vmatpush.bf16.msra.mxu0 0
      %1584 = vmatpush.bf16.msra.mxu0 0
      %1585 = vmatpush.bf16.msra.mxu0 0
      %1586 = vmatpush.bf16.msra.mxu0 0
      %1587 = vmatpush.bf16.msra.mxu0 %v1529
      %1588 = vmatpush.bf16.msra.mxu0 %v1528
      %1589 = vmatmul.bf16.gmra.mxu0 %v1534
      %v1590 = vpop.f32.mrf.mxu0
      %v1591 = vadd.f32 %v1518, %v1590
      %v1592 = vpop.f32.mrf.mxu0
      %v1593 = vadd.f32 %v1518, %v1592
      %1594 = vmatmul.bf16.gmra.mxu0 %v1537
      %v1595 = vpop.f32.mrf.mxu0
      %v1596 = vadd.f32 %v1518, %v1595
      %v1597 = vpop.f32.mrf.mxu0
      %v1598 = vadd.f32 %v1518, %v1597
      %1599 = vmatmul.bf16.gmra.mxu0 %v1540
      %v1600 = vpop.f32.mrf.mxu0
      %v1601 = vadd.f32 %v1518, %v1600
      %v1602 = vpop.f32.mrf.mxu0
      %v1603 = vadd.f32 %v1518, %v1602
      %1604 = vmatmul.bf16.gmra.mxu0 %v1543
      %v1605 = vpop.f32.mrf.mxu0
      %v1606 = vadd.f32 %v1518, %v1605
      %v1607 = vpop.f32.mrf.mxu0
      %v1608 = vadd.f32 %v1518, %v1607
      %1609 = vmatmul.bf16.gmra.mxu0 %v1546
      %v1610 = vpop.f32.mrf.mxu0
      %v1611 = vadd.f32 %v1518, %v1610
      %v1612 = vpop.f32.mrf.mxu0
      %v1613 = vadd.f32 %v1518, %v1612
      %1614 = vmatmul.bf16.gmra.mxu0 %v1549
      %v1615 = vpop.f32.mrf.mxu0
      %v1616 = vadd.f32 %v1518, %v1615
      %v1617 = vpop.f32.mrf.mxu0
      %v1618 = vadd.f32 %v1518, %v1617
      %1619 = vmatmul.bf16.gmra.mxu0 %v1552
      %v1620 = vpop.f32.mrf.mxu0
      %v1621 = vadd.f32 %v1518, %v1620
      %v1622 = vpop.f32.mrf.mxu0
      %v1623 = vadd.f32 %v1518, %v1622
      %1624 = vmatmul.bf16.gmra.mxu0 %v1555
      %v1625 = vpop.f32.mrf.mxu0
      %v1626 = vadd.f32 %v1518, %v1625
      %v1627 = vpop.f32.mrf.mxu0
      %v1628 = vadd.f32 %v1518, %v1627
      %1629 = vmatmul.bf16.gmra.mxu0 %v1558
      %v1630 = vpop.f32.mrf.mxu0
      %v1631 = vadd.f32 %v1518, %v1630
      %v1632 = vpop.f32.mrf.mxu0
      %v1633 = vadd.f32 %v1518, %v1632
      %1634 = vmatmul.bf16.gmra.mxu0 %v1561
      %v1635 = vpop.f32.mrf.mxu0
      %v1636 = vadd.f32 %v1518, %v1635
      %v1637 = vpop.f32.mrf.mxu0
      %v1638 = vadd.f32 %v1518, %v1637
      %1639 = vmatmul.bf16.gmra.mxu0 %v1564
      %v1640 = vpop.f32.mrf.mxu0
      %v1641 = vadd.f32 %v1518, %v1640
      %v1642 = vpop.f32.mrf.mxu0
      %v1643 = vadd.f32 %v1518, %v1642
      %1644 = vmatmul.bf16.gmra.mxu0 %v1567
      %v1645 = vpop.f32.mrf.mxu0
      %v1646 = vadd.f32 %v1518, %v1645
      %v1647 = vpop.f32.mrf.mxu0
      %v1648 = vadd.f32 %v1518, %v1647
      %1649 = vmatmul.bf16.gmra.mxu0 %v1570
      %v1650 = vpop.f32.mrf.mxu0
      %v1651 = vadd.f32 %v1518, %v1650
      %v1652 = vpop.f32.mrf.mxu0
      %v1653 = vadd.f32 %v1518, %v1652
      %1654 = vmatmul.bf16.gmra.mxu0 %v1573
      %v1655 = vpop.f32.mrf.mxu0
      %v1656 = vadd.f32 %v1518, %v1655
      %v1657 = vpop.f32.mrf.mxu0
      %v1658 = vadd.f32 %v1518, %v1657
      %1659 = vmatmul.bf16.gmra.mxu0 %v1576
      %v1660 = vpop.f32.mrf.mxu0
      %v1661 = vadd.f32 %v1518, %v1660
      %v1662 = vpop.f32.mrf.mxu0
      %v1663 = vadd.f32 %v1518, %v1662
      %1664 = vmatmul.bf16.gmra.mxu0 %v1579
      %v1665 = vpop.f32.mrf.mxu0
      %v1666 = vadd.f32 %v1518, %v1665
      %v1667 = vpop.f32.mrf.mxu0
      %v1668 = vadd.f32 %v1518, %v1667
      %1669 = vdwg.mxu0
      %s1670 = sld [smem:[#allocation2]]
      %v1671 = vstv %s1670
      %v1672 = vmul.f32 %v1671, %v1591
      %v1673 = vmul.f32 %v1671, %v1593
      %v1674 = vmul.f32 %v1671, %v1596
      %v1675 = vmul.f32 %v1671, %v1598
      %v1676 = vmul.f32 %v1671, %v1601
      %v1677 = vmul.f32 %v1671, %v1603
      %v1678 = vmul.f32 %v1671, %v1606
      %v1679 = vmul.f32 %v1671, %v1608
      %v1680 = vmul.f32 %v1671, %v1611
      %v1681 = vmul.f32 %v1671, %v1613
      %v1682 = vmul.f32 %v1671, %v1616
      %v1683 = vmul.f32 %v1671, %v1618
      %v1684 = vmul.f32 %v1671, %v1621
      %v1685 = vmul.f32 %v1671, %v1623
      %v1686 = vmul.f32 %v1671, %v1626
      %v1687 = vmul.f32 %v1671, %v1628
      %v1688 = vmul.f32 %v1671, %v1631
      %v1689 = vmul.f32 %v1671, %v1633
      %v1690 = vmul.f32 %v1671, %v1636
      %v1691 = vmul.f32 %v1671, %v1638
      %v1692 = vmul.f32 %v1671, %v1641
      %v1693 = vmul.f32 %v1671, %v1643
      %v1694 = vmul.f32 %v1671, %v1646
      %v1695 = vmul.f32 %v1671, %v1648
      %v1696 = vmul.f32 %v1671, %v1651
      %v1697 = vmul.f32 %v1671, %v1653
      %v1698 = vmul.f32 %v1671, %v1656
      %v1699 = vmul.f32 %v1671, %v1658
      %v1700 = vmul.f32 %v1671, %v1661
      %v1701 = vmul.f32 %v1671, %v1663
      %v1702 = vmul.f32 %v1671, %v1666
      %v1703 = vmul.f32 %v1671, %v1668
      %v1704 = vadd.f32 %v449, %v1672
      %v1705 = vadd.f32 %v450, %v1673
      %v1706 = vadd.f32 %v451, %v1674
      %v1707 = vadd.f32 %v452, %v1675
      %v1708 = vadd.f32 %v453, %v1676
      %v1709 = vadd.f32 %v454, %v1677
      %v1710 = vadd.f32 %v455, %v1678
      %v1711 = vadd.f32 %v456, %v1679
      %v1712 = vadd.f32 %v457, %v1680
      %v1713 = vadd.f32 %v458, %v1681
      %v1714 = vadd.f32 %v459, %v1682
      %v1715 = vadd.f32 %v460, %v1683
      %v1716 = vadd.f32 %v461, %v1684
      %v1717 = vadd.f32 %v462, %v1685
      %v1718 = vadd.f32 %v463, %v1686
      %v1719 = vadd.f32 %v464, %v1687
      %v1720 = vadd.f32 %v465, %v1688
      %v1721 = vadd.f32 %v466, %v1689
      %v1722 = vadd.f32 %v467, %v1690
      %v1723 = vadd.f32 %v468, %v1691
      %v1724 = vadd.f32 %v469, %v1692
      %v1725 = vadd.f32 %v470, %v1693
      %v1726 = vadd.f32 %v471, %v1694
      %v1727 = vadd.f32 %v472, %v1695
      %v1728 = vadd.f32 %v473, %v1696
      %v1729 = vadd.f32 %v474, %v1697
      %v1730 = vadd.f32 %v475, %v1698
      %v1731 = vadd.f32 %v476, %v1699
      %v1732 = vadd.f32 %v477, %v1700
      %v1733 = vadd.f32 %v478, %v1701
      %v1734 = vadd.f32 %v479, %v1702
      %v1735 = vadd.f32 %v480, %v1703
      %1736 = vst.msk [vmem:[%s436] sm:$0xff] %vm529, %v1704
      %1737 = vst.msk [vmem:[%s436 + $0x8] sm:$0xff] %vm529, %v1705
      %1738 = vst.msk [vmem:[%s436 + $0x10] sm:$0xff] %vm529, %v1706
      %1739 = vst.msk [vmem:[%s436 + $0x18] sm:$0xff] %vm529, %v1707
      %1740 = vst.msk [vmem:[%s436 + $0x20] sm:$0xff] %vm529, %v1708
      %1741 = vst.msk [vmem:[%s436 + $0x28] sm:$0xff] %vm529, %v1709
      %1742 = vst.msk [vmem:[%s436 + $0x30] sm:$0xff] %vm529, %v1710
      %1743 = vst.msk [vmem:[%s436 + $0x38] sm:$0xff] %vm529, %v1711
      %1744 = vst.msk [vmem:[%s436 + $0x40] sm:$0xff] %vm529, %v1712
      %1745 = vst.msk [vmem:[%s436 + $0x48] sm:$0xff] %vm529, %v1713
      %1746 = vst.msk [vmem:[%s436 + $0x50] sm:$0xff] %vm529, %v1714
      %1747 = vst.msk [vmem:[%s436 + $0x58] sm:$0xff] %vm529, %v1715
      %1748 = vst.msk [vmem:[%s436 + $0x60] sm:$0xff] %vm529, %v1716
      %1749 = vst.msk [vmem:[%s436 + $0x68] sm:$0xff] %vm529, %v1717
      %1750 = vst.msk [vmem:[%s436 + $0x70] sm:$0xff] %vm529, %v1718
      %1751 = vst.msk [vmem:[%s436 + $0x78] sm:$0xff] %vm529, %v1719
      %1752 = vst.msk [vmem:[%s436 + $0x80] sm:$0xff] %vm529, %v1720
      %1753 = vst.msk [vmem:[%s436 + $0x88] sm:$0xff] %vm529, %v1721
      %1754 = vst.msk [vmem:[%s436 + $0x90] sm:$0xff] %vm529, %v1722
      %1755 = vst.msk [vmem:[%s436 + $0x98] sm:$0xff] %vm529, %v1723
      %1756 = vst.msk [vmem:[%s436 + $0xa0] sm:$0xff] %vm529, %v1724
      %1757 = vst.msk [vmem:[%s436 + $0xa8] sm:$0xff] %vm529, %v1725
      %1758 = vst.msk [vmem:[%s436 + $0xb0] sm:$0xff] %vm529, %v1726
      %1759 = vst.msk [vmem:[%s436 + $0xb8] sm:$0xff] %vm529, %v1727
      %1760 = vst.msk [vmem:[%s436 + $0xc0] sm:$0xff] %vm529, %v1728
      %1761 = vst.msk [vmem:[%s436 + $0xc8] sm:$0xff] %vm529, %v1729
      %1762 = vst.msk [vmem:[%s436 + $0xd0] sm:$0xff] %vm529, %v1730
      %1763 = vst.msk [vmem:[%s436 + $0xd8] sm:$0xff] %vm529, %v1731
      %1764 = vst.msk [vmem:[%s436 + $0xe0] sm:$0xff] %vm529, %v1732
      %1765 = vst.msk [vmem:[%s436 + $0xe8] sm:$0xff] %vm529, %v1733
      %1766 = vst.msk [vmem:[%s436 + $0xf0] sm:$0xff] %vm529, %v1734
      %1767 = vst.msk [vmem:[%s436 + $0xf8] sm:$0xff] %vm529, %v1735
      %s1768 = smul.u32 32, %s27
      %p1769 = scmp.lt.s32.totalorder %s26, 1
      %s1770 = scalar_select %p1769, %s26, 1
      %p1771 = scmp.lt.s32.totalorder %s1768, 31
      %s1772 = scalar_select %p1771, %s1768, 31
      %s1773 = smul.addr %s1770, 32
      %s1774 = sadd.s32 %s1772, %s1773
      %s1775 = smul.addr %s1774, 8
      %s1776 = scalar_lea.vmem %s8, %s1775
      %s1777 = smul.u32 32, %s27
      %p1778 = scmp.lt.s32.totalorder %s26, 1
      %s1779 = scalar_select %p1778, %s26, 1
      %p1780 = scmp.lt.s32.totalorder %s1777, 31
      %s1781 = scalar_select %p1780, %s1777, 31
      %s1782 = smul.addr %s1779, 32
      %s1783 = sadd.s32 %s1781, %s1782
      %s1784 = smul.addr %s1783, 4
      %s1785 = scalar_lea.vmem %s9, %s1784
      // Predicated region
      $region53: #{tpu_custom_call.1} parent=51 // pred_check
        %p1786 = pneg %p244
      $region54: #{tpu_custom_call.1} parent=51 // pred_check_branch
        %1788 = sbr.rel (%p1786) target = $region56
      $region55: #{tpu_custom_call.1} parent=51 // pred_region
        %s1789 = smul.u32 32, %s27
      $region56: #{tpu_custom_call.1} parent=51 // pred_fallthru
        _
      // Predicated region
      $region57: #{tpu_custom_call.1} parent=51 // pred_check
        %p1790 = pneg %p272
      $region58: #{tpu_custom_call.1} parent=51 // pred_check_branch
        %1792 = sbr.rel (%p1790) target = $region60
      $region59: #{tpu_custom_call.1} parent=51 // pred_region
        %s1793 = smul.u32 32, %s27
      $region60: #{tpu_custom_call.1} parent=51 // pred_fallthru
        _
    $region52: #{tpu_custom_call.1} parent=5 // pred_fallthru
      _
    %p1794 = scmp.le.s32.totalorder 2, %s17
    // Predicated region
    $region61: #{tpu_custom_call.1} parent=5 // pred_check
      %p1795 = pneg %p1794
    $region62: #{tpu_custom_call.1} parent=5 // pred_check_branch
      %1797 = sbr.rel (%p1795) target = $region64
    $region63: #{tpu_custom_call.1} parent=5 // pred_region
      %s1798 = ssub.s32 %s17, 2
      // Predicated region
      $region65: #{tpu_custom_call.1} parent=63 // pred_check
        %p1799 = pneg %p250
      $region66: #{tpu_custom_call.1} parent=63 // pred_check_branch
        %1801 = sbr.rel (%p1799) target = $region68
      $region67: #{tpu_custom_call.1} parent=63 // pred_region
        %s1802 = smul.u32 32, %s29
        %p1803 = scmp.lt.s32.totalorder %s28, 1
        %s1804 = scalar_select %p1803, %s28, 1
        %p1805 = scmp.lt.s32.totalorder %s1802, 31
        %s1806 = scalar_select %p1805, %s1802, 31
        %s1807 = smul.addr %s1804, 32
        %s1808 = sadd.s32 %s1806, %s1807
        %s1809 = smul.addr %s1808, 8
        %s1810 = scalar_lea.vmem %s8, %s1809
      $region68: #{tpu_custom_call.1} parent=63 // pred_fallthru
        _
      // Predicated region
      $region69: #{tpu_custom_call.1} parent=63 // pred_check
        %p1811 = pneg %p278
      $region70: #{tpu_custom_call.1} parent=63 // pred_check_branch
        %1813 = sbr.rel (%p1811) target = $region72
      $region71: #{tpu_custom_call.1} parent=63 // pred_region
        %s1814 = smul.u32 32, %s29
        %p1815 = scmp.lt.s32.totalorder %s28, 1
        %s1816 = scalar_select %p1815, %s28, 1
        %p1817 = scmp.lt.s32.totalorder %s1814, 31
        %s1818 = scalar_select %p1817, %s1814, 31
        %s1819 = smul.addr %s1816, 32
        %s1820 = sadd.s32 %s1818, %s1819
        %s1821 = smul.addr %s1820, 4
        %s1822 = scalar_lea.vmem %s9, %s1821
      $region72: #{tpu_custom_call.1} parent=63 // pred_fallthru
        _
    $region64: #{tpu_custom_call.1} parent=5 // pred_fallthru
      _
  $region6: #{tpu_custom_call.1} parent=0 // loop_footer
    %s21 = sadd.s32 1, %s17
  $region7: #{tpu_custom_call.1} parent=0 // loop_footer_branch
    %16 = sbr.rel target = $region3
  $region8: #{tpu_custom_call.1} parent=0 // loop_exit
    _

</llo_original>
